<compile_context>
chip_gen: v5e
topology: v5e:2x2
jax: 0.10.0
libtpu: 0.0.40
codegen_flags: <defaults>
</compile_context>

<pallas_src>
import jax
import jax.numpy as jnp
from jax.experimental import pallas as pl
from jax.experimental.pallas import tpu as pltpu

NEG_SLOPE = 0.01   # F.leaky_relu default
BN_EPS = 1e-5      # nn.BatchNorm1d default
FC_HIDDEN = 32     # nn.Linear(C, 32) hard-coded by the module


def make_cnn_kernel(num_layers, model_name, num_channels, batch, seq_len, seq_pad):
    """Build the fused forward kernel (trace-time configuration)."""
    if model_name not in ('vanilla_cnn', 'residual_cnn'):
        raise Exception(f"Not a valid model_name {model_name}.")

    C = num_channels
    B = batch
    L = seq_len
    Lpad = seq_pad           # power of two, >= L + 1
    N = B * Lpad             # flattened lane axis: n = b*Lpad + t
    inv_n = 1.0 / float(B * L)   # BatchNorm1d batch statistics over N and L
    inv_L = 1.0 / float(L)       # AvgPool1d(kernel_size=L)
    residual = (model_name == 'residual_cnn')

    def kernel(x_ref, conv_w_ref, bn_ref, fc_ref, out_ref):
        # Valid-column mask (t < L within each Lpad block), materialized ONCE at
        # full (C, N) so the per-layer multiplies don't re-broadcast inside the
        # loop (broadcast_in_dim is not CSE'd).
        lane = jax.lax.broadcasted_iota(jnp.int32, (C, N), 1)
        colmask = (jnp.bitwise_and(lane, Lpad - 1) < L).astype(jnp.float32)

        # Activations: (C, N).  Invariant: columns with t >= L are exactly zero
        # at the top of every layer (needed by the roll taps and BN stats).
        x = jnp.broadcast_to(x_ref[...], (C, N))          # (1,N) -> (C,N)

        for i in range(num_layers):
            w = conv_w_ref[i]                             # (C, 3C); layer 0 zero-padded
            gb = bn_ref[i]                                # (2, C, 1)
            gamma, beta = gb[0], gb[1]                    # (C, 1) each

            # 'same' conv taps as XLU lane rotations; the wrap-around lands in
            # the zero padding columns so no boundary masks are needed.
            xm = pltpu.roll(x, 1, axis=1)                 # x[t-1]
            xp = pltpu.roll(x, N - 1, axis=1)             # x[t+1]  (== roll by -1)
            xcat = jnp.concatenate([xm, x, xp], axis=0)   # (3C, N)

            # One 2-D MXU matmul per layer: (C, 3C) @ (3C, B*Lpad).
            y = jnp.dot(w, xcat, preferred_element_type=jnp.float32)   # (C, N)
            ym = y * colmask                              # zero pad columns for stats

            # One-pass BatchNorm1d stats (training-mode, biased var): stack
            # [y, y*y] and do a single cross-lane reduce.
            s12 = jnp.sum(jnp.concatenate([ym, ym * ym], axis=0),
                          axis=1, keepdims=True) * inv_n  # (2C, 1)
            mu = s12[:C]
            var = jnp.maximum(s12[C:] - mu * mu, 0.0)     # clamp tiny cancellation
            scale = gamma * jax.lax.rsqrt(var + BN_EPS)   # (C, 1)
            shift = beta - mu * scale

            v = ym * scale + shift
            # Leaky ReLU with the pad mask folded in: keeps act == 0 on padding
            # columns so the residual add preserves the zero-padding invariant
            # (no trailing x*colmask pass).
            act = jnp.where(v >= 0, v, NEG_SLOPE * v) * colmask

            if residual:
                x = x + act      # i == 0: broadcast x == x.repeat(1, C, 1)
            else:
                x = act

        # AvgPool1d(L) over the full (valid) sequence: per-batch-block lane
        # reduce over vreg-aligned 256-lane slices.
        cols = [jnp.sum(x[:, b * Lpad:(b + 1) * Lpad], axis=1, keepdims=True)
                for b in range(B)]
        pooled = jnp.concatenate(cols, axis=1) * inv_L            # (C, B)

        # FC stage in transposed orientation (features on sublanes, batch lanes).
        fcp = fc_ref[...]                                          # (32+out, W)
        w1 = fcp[:FC_HIDDEN, :C]                                   # (32, C)
        b1 = fcp[:FC_HIDDEN, C:C + 1]                              # (32, 1)
        w2 = fcp[FC_HIDDEN:, :FC_HIDDEN]                           # (out, 32)
        b2 = fcp[FC_HIDDEN:, FC_HIDDEN:FC_HIDDEN + 1]              # (out, 1)

        h = jnp.dot(w1, pooled, preferred_element_type=jnp.float32) + b1
        h = jnp.where(h >= 0, h, NEG_SLOPE * h)
        out_ref[...] = jnp.dot(w2, h, preferred_element_type=jnp.float32) + b2

    return kernel


def cnn_forward_pallas(x, params, cfg):
    """x: (B, L, 1) float32, matching the PyTorch module's input convention."""
    B, L, cin = x.shape
    assert cin == 1
    assert L == 187, "AvgPool1d(kernel_size=187) requires sequence length 187"
    C = cfg['cnn_num_channels']
    n_layers = cfg['cnn_num_layers']
    out_dim = 1 if cfg['dataset_name'] == 'ptbdb' else 5
    Lpad = 256                      # power of two, >= L + 1 (roll wrap-around)
    assert Lpad & (Lpad - 1) == 0 and Lpad >= L + 1
    N = B * Lpad

    # (B, L, 1) -> (1, B*Lpad): time-within-batch on the lane axis, zero-padded.
    x3 = jnp.transpose(x, (0, 2, 1)).astype(jnp.float32)          # (B, 1, L)
    x3 = jnp.pad(x3, ((0, 0), (0, 0), (0, Lpad - L)))             # (B, 1, Lpad)
    x_in = x3.reshape(1, N)                                       # n = b*Lpad + t

    # Conv weights packed into one (n_layers, C, 3C) array; column j = k*C + c.
    # Layer 0 (Cin=1) is zero-padded so only the c == 0 columns are nonzero.
    wl = []
    for i in range(n_layers):
        w = params['conv_w'][i].astype(jnp.float32)               # (C, cin_i, 3)
        cin_i = w.shape[1]
        wk = jnp.zeros((C, 3, C), jnp.float32)
        wk = wk.at[:, :, :cin_i].set(jnp.transpose(w, (0, 2, 1)))
        wl.append(wk.reshape(C, 3 * C))
    conv_w_all = jnp.stack(wl, axis=0)                            # (nl, C, 3C)

    # BN affine packed into one (n_layers, 2, C, 1) array.
    bn_all = jnp.stack(
        [jnp.stack([params['bn_gamma'][i].reshape(C, 1),
                    params['bn_beta'][i].reshape(C, 1)], axis=0)
         for i in range(n_layers)], axis=0).astype(jnp.float32)

    # FC params packed into one array: rows [:32] = fc1 (weight | bias),
    # rows [32:] = fc2 (weight | bias).
    fc_w = max(C + 1, FC_HIDDEN + 1)
    fcp = jnp.zeros((FC_HIDDEN + out_dim, fc_w), jnp.float32)
    fcp = fcp.at[:FC_HIDDEN, :C].set(params['fc1_w'].astype(jnp.float32))
    fcp = fcp.at[:FC_HIDDEN, C].set(params['fc1_b'].astype(jnp.float32))
    fcp = fcp.at[FC_HIDDEN:, :FC_HIDDEN].set(params['fc2_w'].astype(jnp.float32))
    fcp = fcp.at[FC_HIDDEN:, FC_HIDDEN].set(params['fc2_b'].astype(jnp.float32))

    kernel = make_cnn_kernel(n_layers, cfg['model_name'], C, B, L, Lpad)
    vmem = pl.BlockSpec(memory_space=pltpu.MemorySpace.VMEM)
    out_t = pl.pallas_call(
        kernel,
        out_shape=jax.ShapeDtypeStruct((out_dim, B), jnp.float32),
        in_specs=[vmem, vmem, vmem, vmem],
        out_specs=vmem,
        compiler_params=pltpu.CompilerParams(vmem_limit_bytes=4 * 1024 * 1024),
    )(x_in, conv_w_all, bn_all, fcp)
    return out_t.T                                                # (B, out_dim)


def reference_forward(x, params, cfg):
    """Pure-JAX reference with torch-style NCL layout (for cross-checking)."""
    n_layers = cfg['cnn_num_layers']
    h = jnp.transpose(x, (0, 2, 1))  # (B, 1, L)
    for i in range(n_layers):
        w = params['conv_w'][i]      # (Cout, Cin, 3)
        y = jax.lax.conv_general_dilated(
            h, w, window_strides=(1,), padding=((1, 1),),
            dimension_numbers=('NCH', 'OIH', 'NCH'))
        mu = jnp.mean(y, axis=(0, 2), keepdims=True)
        var = jnp.mean((y - mu) ** 2, axis=(0, 2), keepdims=True)
        ybn = ((y - mu) / jnp.sqrt(var + BN_EPS)
               * params['bn_gamma'][i][None, :, None]
               + params['bn_beta'][i][None, :, None])
        act = jnp.where(ybn >= 0, ybn, NEG_SLOPE * ybn)
        if cfg['model_name'] == 'residual_cnn':
            h = (jnp.broadcast_to(h, act.shape) if i == 0 else h) + act
        else:
            h = act
    pooled = jnp.mean(h, axis=2)                       # AvgPool1d(187) + squeeze
    z = pooled @ params['fc1_w'].T + params['fc1_b']
    z = jnp.where(z >= 0, z, NEG_SLOPE * z)
    return z @ params['fc2_w'].T + params['fc2_b']


def init_params(key, cfg):
    C = cfg['cnn_num_channels']
    n_layers = cfg['cnn_num_layers']
    out_dim = 1 if cfg['dataset_name'] == 'ptbdb' else 5
    keys = jax.random.split(key, 3 * n_layers + 4)
    params = {'conv_w': [], 'bn_gamma': [], 'bn_beta': []}
    for i in range(n_layers):
        cin = 1 if i == 0 else C
        scale = 1.0 / jnp.sqrt(3.0 * cin)
        params['conv_w'].append(
            scale * jax.random.normal(keys[3 * i], (C, cin, 3), jnp.float32))
        params['bn_gamma'].append(
            1.0 + 0.1 * jax.random.normal(keys[3 * i + 1], (C,), jnp.float32))
        params['bn_beta'].append(
            0.1 * jax.random.normal(keys[3 * i + 2], (C,), jnp.float32))
    k = 3 * n_layers
    params['fc1_w'] = (1.0 / jnp.sqrt(C)) * jax.random.normal(keys[k], (32, C), jnp.float32)
    params['fc1_b'] = 0.1 * jax.random.normal(keys[k + 1], (32,), jnp.float32)
    params['fc2_w'] = (1.0 / jnp.sqrt(32.0)) * jax.random.normal(keys[k + 2], (out_dim, 32), jnp.float32)
    params['fc2_b'] = 0.1 * jax.random.normal(keys[k + 3], (out_dim,), jnp.float32)
    return params


if __name__ == "__main__":
    B, L = 4, 187   # L fixed at 187 by AvgPool1d(kernel_size=187)
    key = jax.random.PRNGKey(0)

    for model_name, dataset_name, out_dim in [('vanilla_cnn', 'mitbih', 5),
                                              ('residual_cnn', 'ptbdb', 1)]:
        cfg = {
            'cnn_num_layers': 3,
            'cnn_num_channels': 8,
            'model_name': model_name,
            'dataset_name': dataset_name,
        }
        k_x, k_p, key = jax.random.split(key, 3)
        x = jax.random.normal(k_x, (B, L, 1), jnp.float32)
        params = init_params(k_p, cfg)

        out = jax.block_until_ready(cnn_forward_pallas(x, params, cfg))
        ref = reference_forward(x, params, cfg)
        assert out.shape == ref.shape == (B, out_dim), (out.shape, ref.shape)
        assert jnp.allclose(out, ref, atol=2e-3, rtol=2e-3), (model_name, out, ref)

    print("KERNEL_OK")
</pallas_src>

<mosaic_0001>
module attributes {stable_mosaic.version = 11 : i64} {
  func.func @kernel(%arg0: memref<1x1024xf32, #tpu.memory_space<vmem>>, %arg1: memref<3x8x24xf32, #tpu.memory_space<vmem>>, %arg2: memref<3x2x8x1xf32, #tpu.memory_space<vmem>>, %arg3: memref<37x33xf32, #tpu.memory_space<vmem>>, %arg4: memref<5x4xf32, #tpu.memory_space<vmem>>) attributes {dimension_semantics = [], scalar_prefetch = 0 : i64, scratch_operands = 0 : i64, tpu.core_type = #tpu.core_type<tc>} {
    %0 = tpu.iota {dimensions = array<i32: 1>} : vector<8x1024xi32>
    %c255_i32 = arith.constant 255 : i32
    %1 = vector.broadcast %c255_i32 : i32 to vector<8x1024xi32>
    %2 = arith.andi %0, %1 : vector<8x1024xi32>
    %c187_i32 = arith.constant 187 : i32
    %3 = vector.broadcast %c187_i32 : i32 to vector<8x1024xi32>
    %4 = arith.cmpi slt, %2, %3 : vector<8x1024xi32>
    %5 = arith.extui %4 : vector<8x1024xi1> to vector<8x1024xi32>
    %6 = arith.sitofp %5 : vector<8x1024xi32> to vector<8x1024xf32>
    %c0 = arith.constant 0 : index
    %c0_0 = arith.constant 0 : index
    %7 = vector.load %arg0[%c0, %c0_0] : memref<1x1024xf32, #tpu.memory_space<vmem>>, vector<1x1024xf32>
    %8 = vector.shape_cast %7 : vector<1x1024xf32> to vector<1x1024xf32>
    %9 = vector.broadcast %8 : vector<1x1024xf32> to vector<8x1024xf32>
    %c0_1 = arith.constant 0 : index
    %c0_2 = arith.constant 0 : index
    %c0_3 = arith.constant 0 : index
    %10 = vector.load %arg1[%c0_1, %c0_2, %c0_3] : memref<3x8x24xf32, #tpu.memory_space<vmem>>, vector<1x8x24xf32>
    %11 = vector.shape_cast %10 : vector<1x8x24xf32> to vector<8x24xf32>
    %c0_4 = arith.constant 0 : index
    %c0_5 = arith.constant 0 : index
    %c0_6 = arith.constant 0 : index
    %c0_7 = arith.constant 0 : index
    %12 = vector.load %arg2[%c0_4, %c0_5, %c0_6, %c0_7] : memref<3x2x8x1xf32, #tpu.memory_space<vmem>>, vector<1x2x8x1xf32>
    %13 = vector.shape_cast %12 : vector<1x2x8x1xf32> to vector<2x8x1xf32>
    %14 = vector.extract_strided_slice %13 {offsets = [0, 0, 0], sizes = [1, 8, 1], strides = [1, 1, 1]} : vector<2x8x1xf32> to vector<1x8x1xf32>
    %15 = vector.shape_cast %14 : vector<1x8x1xf32> to vector<8x1xf32>
    %16 = vector.extract_strided_slice %13 {offsets = [1, 0, 0], sizes = [1, 8, 1], strides = [1, 1, 1]} : vector<2x8x1xf32> to vector<1x8x1xf32>
    %17 = vector.shape_cast %16 : vector<1x8x1xf32> to vector<8x1xf32>
    %c1_i32 = arith.constant 1 : i32
    %18 = tpu.dynamic_rotate %9 by %c1_i32 dim 1 : vector<8x1024xf32>, i32 -> vector<8x1024xf32>
    %c1023_i32 = arith.constant 1023 : i32
    %19 = tpu.dynamic_rotate %9 by %c1023_i32 dim 1 : vector<8x1024xf32>, i32 -> vector<8x1024xf32>
    %20 = tpu.concatenate %18, %9, %19 in 0 : vector<8x1024xf32>, vector<8x1024xf32>, vector<8x1024xf32> -> vector<24x1024xf32>
    %cst = arith.constant dense<0.000000e+00> : vector<8x1024xf32>
    %21 = tpu.matmul %11, %20, %cst {dimension_numbers = #tpu.dot_dimension_numbers<[1], [0], [0], [1], [0, 0, 1, 1], [], []>} : vector<8x24xf32>, vector<24x1024xf32>, vector<8x1024xf32> -> vector<8x1024xf32>
    %22 = arith.mulf %21, %6 : vector<8x1024xf32>
    %23 = arith.mulf %22, %22 : vector<8x1024xf32>
    %24 = tpu.concatenate %22, %23 in 0 : vector<8x1024xf32>, vector<8x1024xf32> -> vector<16x1024xf32>
    %cst_8 = arith.constant dense<0.000000e+00> : vector<16xf32>
    %25 = vector.multi_reduction <add>, %24, %cst_8 [1] : vector<16x1024xf32> to vector<16xf32>
    %26 = vector.shape_cast %25 : vector<16xf32> to vector<16x1xf32>
    %cst_9 = arith.constant 0.00133689842 : f32
    %27 = vector.broadcast %cst_9 : f32 to vector<16x1xf32>
    %28 = arith.mulf %26, %27 : vector<16x1xf32>
    %29 = vector.extract_strided_slice %28 {offsets = [0, 0], sizes = [8, 1], strides = [1, 1]} : vector<16x1xf32> to vector<8x1xf32>
    %30 = vector.extract_strided_slice %28 {offsets = [8, 0], sizes = [8, 1], strides = [1, 1]} : vector<16x1xf32> to vector<8x1xf32>
    %31 = arith.mulf %29, %29 : vector<8x1xf32>
    %32 = arith.subf %30, %31 : vector<8x1xf32>
    %cst_10 = arith.constant 0.000000e+00 : f32
    %33 = vector.broadcast %cst_10 : f32 to vector<8x1xf32>
    %34 = arith.maximumf %32, %33 : vector<8x1xf32>
    %cst_11 = arith.constant 9.99999974E-6 : f32
    %35 = vector.broadcast %cst_11 : f32 to vector<8x1xf32>
    %36 = arith.addf %34, %35 : vector<8x1xf32>
    %37 = math.rsqrt %36 : vector<8x1xf32>
    %38 = arith.mulf %15, %37 : vector<8x1xf32>
    %39 = arith.mulf %29, %38 : vector<8x1xf32>
    %40 = arith.subf %17, %39 : vector<8x1xf32>
    %41 = vector.broadcast %38 : vector<8x1xf32> to vector<8x1024xf32>
    %42 = arith.mulf %22, %41 : vector<8x1024xf32>
    %43 = vector.broadcast %40 : vector<8x1xf32> to vector<8x1024xf32>
    %44 = arith.addf %42, %43 : vector<8x1024xf32>
    %cst_12 = arith.constant 0.000000e+00 : f32
    %45 = vector.broadcast %cst_12 : f32 to vector<8x1024xf32>
    %46 = arith.cmpf oge, %44, %45 : vector<8x1024xf32>
    %cst_13 = arith.constant 0.00999999977 : f32
    %47 = vector.broadcast %cst_13 : f32 to vector<8x1024xf32>
    %48 = arith.mulf %47, %44 : vector<8x1024xf32>
    %49 = arith.select %46, %44, %48 : vector<8x1024xi1>, vector<8x1024xf32>
    %50 = arith.mulf %49, %6 : vector<8x1024xf32>
    %c1 = arith.constant 1 : index
    %c0_14 = arith.constant 0 : index
    %c0_15 = arith.constant 0 : index
    %51 = vector.load %arg1[%c1, %c0_14, %c0_15] : memref<3x8x24xf32, #tpu.memory_space<vmem>>, vector<1x8x24xf32>
    %52 = vector.shape_cast %51 : vector<1x8x24xf32> to vector<8x24xf32>
    %c1_16 = arith.constant 1 : index
    %c0_17 = arith.constant 0 : index
    %c0_18 = arith.constant 0 : index
    %c0_19 = arith.constant 0 : index
    %53 = vector.load %arg2[%c1_16, %c0_17, %c0_18, %c0_19] : memref<3x2x8x1xf32, #tpu.memory_space<vmem>>, vector<1x2x8x1xf32>
    %54 = vector.shape_cast %53 : vector<1x2x8x1xf32> to vector<2x8x1xf32>
    %55 = vector.extract_strided_slice %54 {offsets = [0, 0, 0], sizes = [1, 8, 1], strides = [1, 1, 1]} : vector<2x8x1xf32> to vector<1x8x1xf32>
    %56 = vector.shape_cast %55 : vector<1x8x1xf32> to vector<8x1xf32>
    %57 = vector.extract_strided_slice %54 {offsets = [1, 0, 0], sizes = [1, 8, 1], strides = [1, 1, 1]} : vector<2x8x1xf32> to vector<1x8x1xf32>
    %58 = vector.shape_cast %57 : vector<1x8x1xf32> to vector<8x1xf32>
    %c1_i32_20 = arith.constant 1 : i32
    %59 = tpu.dynamic_rotate %50 by %c1_i32_20 dim 1 : vector<8x1024xf32>, i32 -> vector<8x1024xf32>
    %c1023_i32_21 = arith.constant 1023 : i32
    %60 = tpu.dynamic_rotate %50 by %c1023_i32_21 dim 1 : vector<8x1024xf32>, i32 -> vector<8x1024xf32>
    %61 = tpu.concatenate %59, %50, %60 in 0 : vector<8x1024xf32>, vector<8x1024xf32>, vector<8x1024xf32> -> vector<24x1024xf32>
    %cst_22 = arith.constant dense<0.000000e+00> : vector<8x1024xf32>
    %62 = tpu.matmul %52, %61, %cst_22 {dimension_numbers = #tpu.dot_dimension_numbers<[1], [0], [0], [1], [0, 0, 1, 1], [], []>} : vector<8x24xf32>, vector<24x1024xf32>, vector<8x1024xf32> -> vector<8x1024xf32>
    %63 = arith.mulf %62, %6 : vector<8x1024xf32>
    %64 = arith.mulf %63, %63 : vector<8x1024xf32>
    %65 = tpu.concatenate %63, %64 in 0 : vector<8x1024xf32>, vector<8x1024xf32> -> vector<16x1024xf32>
    %cst_23 = arith.constant dense<0.000000e+00> : vector<16xf32>
    %66 = vector.multi_reduction <add>, %65, %cst_23 [1] : vector<16x1024xf32> to vector<16xf32>
    %67 = vector.shape_cast %66 : vector<16xf32> to vector<16x1xf32>
    %cst_24 = arith.constant 0.00133689842 : f32
    %68 = vector.broadcast %cst_24 : f32 to vector<16x1xf32>
    %69 = arith.mulf %67, %68 : vector<16x1xf32>
    %70 = vector.extract_strided_slice %69 {offsets = [0, 0], sizes = [8, 1], strides = [1, 1]} : vector<16x1xf32> to vector<8x1xf32>
    %71 = vector.extract_strided_slice %69 {offsets = [8, 0], sizes = [8, 1], strides = [1, 1]} : vector<16x1xf32> to vector<8x1xf32>
    %72 = arith.mulf %70, %70 : vector<8x1xf32>
    %73 = arith.subf %71, %72 : vector<8x1xf32>
    %cst_25 = arith.constant 0.000000e+00 : f32
    %74 = vector.broadcast %cst_25 : f32 to vector<8x1xf32>
    %75 = arith.maximumf %73, %74 : vector<8x1xf32>
    %cst_26 = arith.constant 9.99999974E-6 : f32
    %76 = vector.broadcast %cst_26 : f32 to vector<8x1xf32>
    %77 = arith.addf %75, %76 : vector<8x1xf32>
    %78 = math.rsqrt %77 : vector<8x1xf32>
    %79 = arith.mulf %56, %78 : vector<8x1xf32>
    %80 = arith.mulf %70, %79 : vector<8x1xf32>
    %81 = arith.subf %58, %80 : vector<8x1xf32>
    %82 = vector.broadcast %79 : vector<8x1xf32> to vector<8x1024xf32>
    %83 = arith.mulf %63, %82 : vector<8x1024xf32>
    %84 = vector.broadcast %81 : vector<8x1xf32> to vector<8x1024xf32>
    %85 = arith.addf %83, %84 : vector<8x1024xf32>
    %cst_27 = arith.constant 0.000000e+00 : f32
    %86 = vector.broadcast %cst_27 : f32 to vector<8x1024xf32>
    %87 = arith.cmpf oge, %85, %86 : vector<8x1024xf32>
    %cst_28 = arith.constant 0.00999999977 : f32
    %88 = vector.broadcast %cst_28 : f32 to vector<8x1024xf32>
    %89 = arith.mulf %88, %85 : vector<8x1024xf32>
    %90 = arith.select %87, %85, %89 : vector<8x1024xi1>, vector<8x1024xf32>
    %91 = arith.mulf %90, %6 : vector<8x1024xf32>
    %c2 = arith.constant 2 : index
    %c0_29 = arith.constant 0 : index
    %c0_30 = arith.constant 0 : index
    %92 = vector.load %arg1[%c2, %c0_29, %c0_30] : memref<3x8x24xf32, #tpu.memory_space<vmem>>, vector<1x8x24xf32>
    %93 = vector.shape_cast %92 : vector<1x8x24xf32> to vector<8x24xf32>
    %c2_31 = arith.constant 2 : index
    %c0_32 = arith.constant 0 : index
    %c0_33 = arith.constant 0 : index
    %c0_34 = arith.constant 0 : index
    %94 = vector.load %arg2[%c2_31, %c0_32, %c0_33, %c0_34] : memref<3x2x8x1xf32, #tpu.memory_space<vmem>>, vector<1x2x8x1xf32>
    %95 = vector.shape_cast %94 : vector<1x2x8x1xf32> to vector<2x8x1xf32>
    %96 = vector.extract_strided_slice %95 {offsets = [0, 0, 0], sizes = [1, 8, 1], strides = [1, 1, 1]} : vector<2x8x1xf32> to vector<1x8x1xf32>
    %97 = vector.shape_cast %96 : vector<1x8x1xf32> to vector<8x1xf32>
    %98 = vector.extract_strided_slice %95 {offsets = [1, 0, 0], sizes = [1, 8, 1], strides = [1, 1, 1]} : vector<2x8x1xf32> to vector<1x8x1xf32>
    %99 = vector.shape_cast %98 : vector<1x8x1xf32> to vector<8x1xf32>
    %c1_i32_35 = arith.constant 1 : i32
    %100 = tpu.dynamic_rotate %91 by %c1_i32_35 dim 1 : vector<8x1024xf32>, i32 -> vector<8x1024xf32>
    %c1023_i32_36 = arith.constant 1023 : i32
    %101 = tpu.dynamic_rotate %91 by %c1023_i32_36 dim 1 : vector<8x1024xf32>, i32 -> vector<8x1024xf32>
    %102 = tpu.concatenate %100, %91, %101 in 0 : vector<8x1024xf32>, vector<8x1024xf32>, vector<8x1024xf32> -> vector<24x1024xf32>
    %cst_37 = arith.constant dense<0.000000e+00> : vector<8x1024xf32>
    %103 = tpu.matmul %93, %102, %cst_37 {dimension_numbers = #tpu.dot_dimension_numbers<[1], [0], [0], [1], [0, 0, 1, 1], [], []>} : vector<8x24xf32>, vector<24x1024xf32>, vector<8x1024xf32> -> vector<8x1024xf32>
    %104 = arith.mulf %103, %6 : vector<8x1024xf32>
    %105 = arith.mulf %104, %104 : vector<8x1024xf32>
    %106 = tpu.concatenate %104, %105 in 0 : vector<8x1024xf32>, vector<8x1024xf32> -> vector<16x1024xf32>
    %cst_38 = arith.constant dense<0.000000e+00> : vector<16xf32>
    %107 = vector.multi_reduction <add>, %106, %cst_38 [1] : vector<16x1024xf32> to vector<16xf32>
    %108 = vector.shape_cast %107 : vector<16xf32> to vector<16x1xf32>
    %cst_39 = arith.constant 0.00133689842 : f32
    %109 = vector.broadcast %cst_39 : f32 to vector<16x1xf32>
    %110 = arith.mulf %108, %109 : vector<16x1xf32>
    %111 = vector.extract_strided_slice %110 {offsets = [0, 0], sizes = [8, 1], strides = [1, 1]} : vector<16x1xf32> to vector<8x1xf32>
    %112 = vector.extract_strided_slice %110 {offsets = [8, 0], sizes = [8, 1], strides = [1, 1]} : vector<16x1xf32> to vector<8x1xf32>
    %113 = arith.mulf %111, %111 : vector<8x1xf32>
    %114 = arith.subf %112, %113 : vector<8x1xf32>
    %cst_40 = arith.constant 0.000000e+00 : f32
    %115 = vector.broadcast %cst_40 : f32 to vector<8x1xf32>
    %116 = arith.maximumf %114, %115 : vector<8x1xf32>
    %cst_41 = arith.constant 9.99999974E-6 : f32
    %117 = vector.broadcast %cst_41 : f32 to vector<8x1xf32>
    %118 = arith.addf %116, %117 : vector<8x1xf32>
    %119 = math.rsqrt %118 : vector<8x1xf32>
    %120 = arith.mulf %97, %119 : vector<8x1xf32>
    %121 = arith.mulf %111, %120 : vector<8x1xf32>
    %122 = arith.subf %99, %121 : vector<8x1xf32>
    %123 = vector.broadcast %120 : vector<8x1xf32> to vector<8x1024xf32>
    %124 = arith.mulf %104, %123 : vector<8x1024xf32>
    %125 = vector.broadcast %122 : vector<8x1xf32> to vector<8x1024xf32>
    %126 = arith.addf %124, %125 : vector<8x1024xf32>
    %cst_42 = arith.constant 0.000000e+00 : f32
    %127 = vector.broadcast %cst_42 : f32 to vector<8x1024xf32>
    %128 = arith.cmpf oge, %126, %127 : vector<8x1024xf32>
    %cst_43 = arith.constant 0.00999999977 : f32
    %129 = vector.broadcast %cst_43 : f32 to vector<8x1024xf32>
    %130 = arith.mulf %129, %126 : vector<8x1024xf32>
    %131 = arith.select %128, %126, %130 : vector<8x1024xi1>, vector<8x1024xf32>
    %132 = arith.mulf %131, %6 : vector<8x1024xf32>
    %133 = vector.extract_strided_slice %132 {offsets = [0, 0], sizes = [8, 256], strides = [1, 1]} : vector<8x1024xf32> to vector<8x256xf32>
    %cst_44 = arith.constant dense<0.000000e+00> : vector<8xf32>
    %134 = vector.multi_reduction <add>, %133, %cst_44 [1] : vector<8x256xf32> to vector<8xf32>
    %135 = vector.shape_cast %134 : vector<8xf32> to vector<8x1xf32>
    %136 = vector.extract_strided_slice %132 {offsets = [0, 256], sizes = [8, 256], strides = [1, 1]} : vector<8x1024xf32> to vector<8x256xf32>
    %cst_45 = arith.constant dense<0.000000e+00> : vector<8xf32>
    %137 = vector.multi_reduction <add>, %136, %cst_45 [1] : vector<8x256xf32> to vector<8xf32>
    %138 = vector.shape_cast %137 : vector<8xf32> to vector<8x1xf32>
    %139 = vector.extract_strided_slice %132 {offsets = [0, 512], sizes = [8, 256], strides = [1, 1]} : vector<8x1024xf32> to vector<8x256xf32>
    %cst_46 = arith.constant dense<0.000000e+00> : vector<8xf32>
    %140 = vector.multi_reduction <add>, %139, %cst_46 [1] : vector<8x256xf32> to vector<8xf32>
    %141 = vector.shape_cast %140 : vector<8xf32> to vector<8x1xf32>
    %142 = vector.extract_strided_slice %132 {offsets = [0, 768], sizes = [8, 256], strides = [1, 1]} : vector<8x1024xf32> to vector<8x256xf32>
    %cst_47 = arith.constant dense<0.000000e+00> : vector<8xf32>
    %143 = vector.multi_reduction <add>, %142, %cst_47 [1] : vector<8x256xf32> to vector<8xf32>
    %144 = vector.shape_cast %143 : vector<8xf32> to vector<8x1xf32>
    %145 = tpu.concatenate %135, %138, %141, %144 in 1 : vector<8x1xf32>, vector<8x1xf32>, vector<8x1xf32>, vector<8x1xf32> -> vector<8x4xf32>
    %cst_48 = arith.constant 0.00534759369 : f32
    %146 = vector.broadcast %cst_48 : f32 to vector<8x4xf32>
    %147 = arith.mulf %145, %146 : vector<8x4xf32>
    %c0_49 = arith.constant 0 : index
    %c0_50 = arith.constant 0 : index
    %148 = vector.load %arg3[%c0_49, %c0_50] : memref<37x33xf32, #tpu.memory_space<vmem>>, vector<37x33xf32>
    %149 = vector.extract_strided_slice %148 {offsets = [0, 0], sizes = [32, 8], strides = [1, 1]} : vector<37x33xf32> to vector<32x8xf32>
    %150 = vector.extract_strided_slice %148 {offsets = [0, 8], sizes = [32, 1], strides = [1, 1]} : vector<37x33xf32> to vector<32x1xf32>
    %151 = vector.extract_strided_slice %148 {offsets = [32, 0], sizes = [5, 32], strides = [1, 1]} : vector<37x33xf32> to vector<5x32xf32>
    %152 = vector.extract_strided_slice %148 {offsets = [32, 32], sizes = [5, 1], strides = [1, 1]} : vector<37x33xf32> to vector<5x1xf32>
    %cst_51 = arith.constant dense<0.000000e+00> : vector<32x4xf32>
    %153 = tpu.matmul %149, %147, %cst_51 {dimension_numbers = #tpu.dot_dimension_numbers<[1], [0], [0], [1], [0, 0, 1, 1], [], []>} : vector<32x8xf32>, vector<8x4xf32>, vector<32x4xf32> -> vector<32x4xf32>
    %154 = vector.broadcast %150 : vector<32x1xf32> to vector<32x4xf32>
    %155 = arith.addf %153, %154 : vector<32x4xf32>
    %cst_52 = arith.constant 0.000000e+00 : f32
    %156 = vector.broadcast %cst_52 : f32 to vector<32x4xf32>
    %157 = arith.cmpf oge, %155, %156 : vector<32x4xf32>
    %cst_53 = arith.constant 0.00999999977 : f32
    %158 = vector.broadcast %cst_53 : f32 to vector<32x4xf32>
    %159 = arith.mulf %158, %155 : vector<32x4xf32>
    %160 = arith.select %157, %155, %159 : vector<32x4xi1>, vector<32x4xf32>
    %cst_54 = arith.constant dense<0.000000e+00> : vector<5x4xf32>
    %161 = tpu.matmul %151, %160, %cst_54 {dimension_numbers = #tpu.dot_dimension_numbers<[1], [0], [0], [1], [0, 0, 1, 1], [], []>} : vector<5x32xf32>, vector<32x4xf32>, vector<5x4xf32> -> vector<5x4xf32>
    %162 = vector.broadcast %152 : vector<5x1xf32> to vector<5x4xf32>
    %163 = arith.addf %161, %162 : vector<5x4xf32>
    %c0_55 = arith.constant 0 : index
    %c0_56 = arith.constant 0 : index
    %164 = vector.load %arg4[%c0_55, %c0_56] : memref<5x4xf32, #tpu.memory_space<vmem>>, vector<5x4xf32>
    tpu.vector_store %arg4[%c0_55, %c0_56], %163 {strides = array<i32>} : memref<5x4xf32, #tpu.memory_space<vmem>>, vector<5x4xf32>,
    return
  }
}

</mosaic_0001>

<llo_original>
// kernel: tpu_custom_call.1
$region0: #{tpu_custom_call.1}
  #allocation0 [shape = 'u32[]', space=smem, size = 0x4, offset = 0x4, fixed_abs, tag = 'smem constant byte address 0x4 - core index']
  #allocation1 [shape = 'u32[72,128]{1,0:T(1,128)}', space=vmem, size = 0x9000, scoped, tag = 'internal scratch']
  %s0 = inlined_call_operand.vmem [shape: f32[1,1024], index: 0, kind: input, shape index: {}]
  %s1 = inlined_call_operand.hbm [shape: f32[3,8,24], index: 1, kind: input, shape index: {}]
  %s2 = inlined_call_operand.vmem [shape: f32[3,2,8,1], index: 2, kind: input, shape index: {}]
  %s3 = inlined_call_operand.vmem [shape: f32[37,33], index: 3, kind: input, shape index: {}]
  %s4 = inlined_call_operand.vmem [shape: f32[5,4], index: 4, kind: output, shape index: {}]
  %s5 = sld [smem:[#allocation0]]
  $region30: #{tpu_custom_call.1} parent=0
    _
  %s7 = ssub.s32 1, %s5
  %s8 = scalar_select 0, %s7, %s5
  $region1: #{tpu_custom_call.1} parent=0
    #allocation2 [shape = 'u8[12288]{0}', space=vmem, size = 0x3000, scoped, tag = 'input window, operand 1, single buffered']
    #allocation3 [shape = 's32[1]{0}', space=sflag, size = 0x4, scoped, tag = 'scoped memory for tpu_custom_call.1']
    %9 = vsyncpa [#allocation3], 0
    // Predicated region
    $region2: #{tpu_custom_call.1} parent=1 // pred_check
      _
    $region3: #{tpu_custom_call.1} parent=1 // pred_check_branch
      %11 = sbr.rel (0) target = $region5
    $region4: #{tpu_custom_call.1} parent=1 // pred_region
      _
    $region5: #{tpu_custom_call.1} parent=1 // pred_fallthru
      _
    // Predicated region
    $region6: #{tpu_custom_call.1} parent=1 // pred_check
      _
    $region7: #{tpu_custom_call.1} parent=1 // pred_check_branch
      %13 = sbr.rel (0) target = $region9
    $region8: #{tpu_custom_call.1} parent=1 // pred_region
      %15 = vsyncadd [#allocation3], 0
      %s16 = sshll.u32 %s1, 4
      %s17 = int_to_ptr.hbm [resolvable:$true] %s16
      %s18 = sshll.u32 [#allocation2], 4
      %s19 = int_to_ptr.vmem [resolvable:$true] %s18
      %24 = dma.hbm_to_vmem [thread:$0]  %s17, 384, %s19, [#allocation3], 128, 128, 8
    $region9: #{tpu_custom_call.1} parent=1 // pred_fallthru
      _
    // Predicated region
    $region10: #{tpu_custom_call.1} parent=1 // pred_check
      _
    $region11: #{tpu_custom_call.1} parent=1 // pred_check_branch
      %26 = sbr.rel (0) target = $region13
    $region12: #{tpu_custom_call.1} parent=1 // pred_region
      _
    $region13: #{tpu_custom_call.1} parent=1 // pred_fallthru
      _
    // Predicated region
    $region14: #{tpu_custom_call.1} parent=1 // pred_check
      _
    $region15: #{tpu_custom_call.1} parent=1 // pred_check_branch
      %28 = sbr.rel (0) target = $region17
    $region16: #{tpu_custom_call.1} parent=1 // pred_region
      _
    $region17: #{tpu_custom_call.1} parent=1 // pred_fallthru
      _
    // Predicated region
    $region18: #{tpu_custom_call.1} parent=1 // pred_check
      _
    $region19: #{tpu_custom_call.1} parent=1 // pred_check_branch
      %30 = sbr.rel (0) target = $region21
    $region20: #{tpu_custom_call.1} parent=1 // pred_region
      %32 = dma.done [#allocation3], 384
    $region21: #{tpu_custom_call.1} parent=1 // pred_fallthru
      _
    %v33 = vlaneseq
    %v34 = vand.u32 %v33, 127
    %v35 = vadd.s32 %v34, 128
    %v36 = vadd.s32 %v34, 256
    %v37 = vadd.s32 %v34, 384
    %v38 = vadd.s32 %v34, 512
    %v39 = vadd.s32 %v34, 640
    %v40 = vadd.s32 %v34, 768
    %v41 = vadd.s32 %v34, 896
    %v42 = vand.u32 %v34, 255
    %v43 = vand.u32 %v35, 255
    %v44 = vand.u32 %v36, 255
    %v45 = vand.u32 %v37, 255
    %v46 = vand.u32 %v38, 255
    %v47 = vand.u32 %v39, 255
    %v48 = vand.u32 %v40, 255
    %v49 = vand.u32 %v41, 255
    %vm50 = vcmp.lt.s32.totalorder %v42, 187
    %vm51 = vcmp.lt.s32.totalorder %v43, 187
    %vm52 = vcmp.lt.s32.totalorder %v44, 187
    %vm53 = vcmp.lt.s32.totalorder %v45, 187
    %vm54 = vcmp.lt.s32.totalorder %v46, 187
    %vm55 = vcmp.lt.s32.totalorder %v47, 187
    %vm56 = vcmp.lt.s32.totalorder %v48, 187
    %vm57 = vcmp.lt.s32.totalorder %v49, 187
    %v58 = vsel %vm50, 1, 0
    %v59 = vsel %vm51, 1, 0
    %v60 = vsel %vm52, 1, 0
    %v61 = vsel %vm53, 1, 0
    %v62 = vsel %vm54, 1, 0
    %v63 = vsel %vm55, 1, 0
    %v64 = vsel %vm56, 1, 0
    %v65 = vsel %vm57, 1, 0
    %v66 = vcvt.s32.f32 %v58
    %v67 = vcvt.s32.f32 %v59
    %v68 = vcvt.s32.f32 %v60
    %v69 = vcvt.s32.f32 %v61
    %v70 = vcvt.s32.f32 %v62
    %v71 = vcvt.s32.f32 %v63
    %v72 = vcvt.s32.f32 %v64
    %v73 = vcvt.s32.f32 %v65
    %v74 = vld [vmem:[%s0] sm:$0xff]
    %v76 = vperm.slane %v74, 0
    %v77 = vperm.slane %v74, 1
    %v78 = vperm.slane %v74, 2
    %v79 = vperm.slane %v74, 3
    %v80 = vperm.slane %v74, 4
    %v81 = vperm.slane %v74, 5
    %v82 = vperm.slane %v74, 6
    %v83 = vperm.slane %v74, 7
    %v92 = vld [vmem:[#allocation2] sm:$0xff]
    %v93 = vld [vmem:[%s2] sm:$0xff]
    %v94 = vld [vmem:[%s2 + $0x8] sm:$0xff]
    %95 = vrot.lane.b32.xlu0 %v76, 1
    %v96 = vpop.permute.xlu0 %95
    %97 = vrot.lane.b32.xlu0 %v77, 1
    %v98 = vpop.permute.xlu0 %97
    %99 = vrot.lane.b32.xlu0 %v78, 1
    %v100 = vpop.permute.xlu0 %99
    %101 = vrot.lane.b32.xlu0 %v79, 1
    %v102 = vpop.permute.xlu0 %101
    %103 = vrot.lane.b32.xlu0 %v80, 1
    %v104 = vpop.permute.xlu0 %103
    %105 = vrot.lane.b32.xlu0 %v81, 1
    %v106 = vpop.permute.xlu0 %105
    %107 = vrot.lane.b32.xlu0 %v82, 1
    %v108 = vpop.permute.xlu0 %107
    %109 = vrot.lane.b32.xlu0 %v83, 1
    %v110 = vpop.permute.xlu0 %109
    %vm111 = vcmp.lt.s32.totalorder %v34, 1
    %v112 = vsel %vm111, %v108, %v110
    %v113 = vsel %vm111, %v106, %v108
    %v114 = vsel %vm111, %v104, %v106
    %v115 = vsel %vm111, %v102, %v104
    %v116 = vsel %vm111, %v100, %v102
    %v117 = vsel %vm111, %v98, %v100
    %v118 = vsel %vm111, %v96, %v98
    %v119 = vsel %vm111, %v110, %v96
    %120 = vrot.lane.b32.xlu0 %v76, 127
    %v121 = vpop.permute.xlu0 %120
    %122 = vrot.lane.b32.xlu0 %v77, 127
    %v123 = vpop.permute.xlu0 %122
    %124 = vrot.lane.b32.xlu0 %v78, 127
    %v125 = vpop.permute.xlu0 %124
    %126 = vrot.lane.b32.xlu0 %v79, 127
    %v127 = vpop.permute.xlu0 %126
    %128 = vrot.lane.b32.xlu0 %v80, 127
    %v129 = vpop.permute.xlu0 %128
    %130 = vrot.lane.b32.xlu0 %v81, 127
    %v131 = vpop.permute.xlu0 %130
    %132 = vrot.lane.b32.xlu0 %v82, 127
    %v133 = vpop.permute.xlu0 %132
    %134 = vrot.lane.b32.xlu0 %v83, 127
    %v135 = vpop.permute.xlu0 %134
    %vm136 = vcmp.lt.s32.totalorder %v34, 127
    %v137 = vsel %vm136, %v133, %v135
    %v138 = vsel %vm136, %v131, %v133
    %v139 = vsel %vm136, %v129, %v131
    %v140 = vsel %vm136, %v127, %v129
    %v141 = vsel %vm136, %v125, %v127
    %v142 = vsel %vm136, %v123, %v125
    %v143 = vsel %vm136, %v121, %v123
    %v144 = vsel %vm136, %v135, %v121
    %vm145 = vcmask 195584
    %v147 = vsel %vm145, %v92, 0
    %149 = vmatpush.msra.mxu0 0.0
    %150 = vmatpush.msra.mxu0 0.0
    %151 = vmatpush.msra.mxu0 0.0
    %152 = vmatpush.msra.mxu0 0.0
    %153 = vmatpush.msra.mxu0 0.0
    %154 = vmatpush.msra.mxu0 0.0
    %155 = vmatpush.msra.mxu0 0.0
    %156 = vmatpush.msra.mxu0 0.0
    %157 = vmatpush.msra.mxu0 0.0
    %158 = vmatpush.msra.mxu0 0.0
    %159 = vmatpush.msra.mxu0 0.0
    %160 = vmatpush.msra.mxu0 0.0
    %161 = vmatpush.msra.mxu0 0.0
    %162 = vmatpush.msra.mxu0 %v143
    %163 = vmatpush.msra.mxu0 %v76
    %164 = vmatpush.msra.mxu0 %v119
    %165 = vmatmul.f32.gmra.mxu0 %v147
    %v166 = vpop.f32.mrf.mxu0
    %v167 = vadd.f32 0.0, %v166
    %168 = vdwg.mxu0
    %169 = vmatpush.msra.mxu0 0.0
    %170 = vmatpush.msra.mxu0 0.0
    %171 = vmatpush.msra.mxu0 0.0
    %172 = vmatpush.msra.mxu0 0.0
    %173 = vmatpush.msra.mxu0 0.0
    %174 = vmatpush.msra.mxu0 0.0
    %175 = vmatpush.msra.mxu0 0.0
    %176 = vmatpush.msra.mxu0 0.0
    %177 = vmatpush.msra.mxu0 0.0
    %178 = vmatpush.msra.mxu0 0.0
    %179 = vmatpush.msra.mxu0 0.0
    %180 = vmatpush.msra.mxu0 0.0
    %181 = vmatpush.msra.mxu0 0.0
    %182 = vmatpush.msra.mxu0 %v142
    %183 = vmatpush.msra.mxu0 %v77
    %184 = vmatpush.msra.mxu0 %v118
    %185 = vmatmul.f32.gmra.mxu0 %v147
    %v186 = vpop.f32.mrf.mxu0
    %v187 = vadd.f32 0.0, %v186
    %188 = vdwg.mxu0
    %189 = vmatpush.msra.mxu0 0.0
    %190 = vmatpush.msra.mxu0 0.0
    %191 = vmatpush.msra.mxu0 0.0
    %192 = vmatpush.msra.mxu0 0.0
    %193 = vmatpush.msra.mxu0 0.0
    %194 = vmatpush.msra.mxu0 0.0
    %195 = vmatpush.msra.mxu0 0.0
    %196 = vmatpush.msra.mxu0 0.0
    %197 = vmatpush.msra.mxu0 0.0
    %198 = vmatpush.msra.mxu0 0.0
    %199 = vmatpush.msra.mxu0 0.0
    %200 = vmatpush.msra.mxu0 0.0
    %201 = vmatpush.msra.mxu0 0.0
    %202 = vmatpush.msra.mxu0 %v141
    %203 = vmatpush.msra.mxu0 %v78
    %204 = vmatpush.msra.mxu0 %v117
    %205 = vmatmul.f32.gmra.mxu0 %v147
    %v206 = vpop.f32.mrf.mxu0
    %v207 = vadd.f32 0.0, %v206
    %208 = vdwg.mxu0
    %209 = vmatpush.msra.mxu0 0.0
    %210 = vmatpush.msra.mxu0 0.0
    %211 = vmatpush.msra.mxu0 0.0
    %212 = vmatpush.msra.mxu0 0.0
    %213 = vmatpush.msra.mxu0 0.0
    %214 = vmatpush.msra.mxu0 0.0
    %215 = vmatpush.msra.mxu0 0.0
    %216 = vmatpush.msra.mxu0 0.0
    %217 = vmatpush.msra.mxu0 0.0
    %218 = vmatpush.msra.mxu0 0.0
    %219 = vmatpush.msra.mxu0 0.0
    %220 = vmatpush.msra.mxu0 0.0
    %221 = vmatpush.msra.mxu0 0.0
    %222 = vmatpush.msra.mxu0 %v140
    %223 = vmatpush.msra.mxu0 %v79
    %224 = vmatpush.msra.mxu0 %v116
    %225 = vmatmul.f32.gmra.mxu0 %v147
    %v226 = vpop.f32.mrf.mxu0
    %v227 = vadd.f32 0.0, %v226
    %228 = vdwg.mxu0
    %229 = vmatpush.msra.mxu0 0.0
    %230 = vmatpush.msra.mxu0 0.0
    %231 = vmatpush.msra.mxu0 0.0
    %232 = vmatpush.msra.mxu0 0.0
    %233 = vmatpush.msra.mxu0 0.0
    %234 = vmatpush.msra.mxu0 0.0
    %235 = vmatpush.msra.mxu0 0.0
    %236 = vmatpush.msra.mxu0 0.0
    %237 = vmatpush.msra.mxu0 0.0
    %238 = vmatpush.msra.mxu0 0.0
    %239 = vmatpush.msra.mxu0 0.0
    %240 = vmatpush.msra.mxu0 0.0
    %241 = vmatpush.msra.mxu0 0.0
    %242 = vmatpush.msra.mxu0 %v139
    %243 = vmatpush.msra.mxu0 %v80
    %244 = vmatpush.msra.mxu0 %v115
    %245 = vmatmul.f32.gmra.mxu0 %v147
    %v246 = vpop.f32.mrf.mxu0
    %v247 = vadd.f32 0.0, %v246
    %248 = vdwg.mxu0
    %249 = vmatpush.msra.mxu0 0.0
    %250 = vmatpush.msra.mxu0 0.0
    %251 = vmatpush.msra.mxu0 0.0
    %252 = vmatpush.msra.mxu0 0.0
    %253 = vmatpush.msra.mxu0 0.0
    %254 = vmatpush.msra.mxu0 0.0
    %255 = vmatpush.msra.mxu0 0.0
    %256 = vmatpush.msra.mxu0 0.0
    %257 = vmatpush.msra.mxu0 0.0
    %258 = vmatpush.msra.mxu0 0.0
    %259 = vmatpush.msra.mxu0 0.0
    %260 = vmatpush.msra.mxu0 0.0
    %261 = vmatpush.msra.mxu0 0.0
    %262 = vmatpush.msra.mxu0 %v138
    %263 = vmatpush.msra.mxu0 %v81
    %264 = vmatpush.msra.mxu0 %v114
    %265 = vmatmul.f32.gmra.mxu0 %v147
    %v266 = vpop.f32.mrf.mxu0
    %v267 = vadd.f32 0.0, %v266
    %268 = vdwg.mxu0
    %269 = vmatpush.msra.mxu0 0.0
    %270 = vmatpush.msra.mxu0 0.0
    %271 = vmatpush.msra.mxu0 0.0
    %272 = vmatpush.msra.mxu0 0.0
    %273 = vmatpush.msra.mxu0 0.0
    %274 = vmatpush.msra.mxu0 0.0
    %275 = vmatpush.msra.mxu0 0.0
    %276 = vmatpush.msra.mxu0 0.0
    %277 = vmatpush.msra.mxu0 0.0
    %278 = vmatpush.msra.mxu0 0.0
    %279 = vmatpush.msra.mxu0 0.0
    %280 = vmatpush.msra.mxu0 0.0
    %281 = vmatpush.msra.mxu0 0.0
    %282 = vmatpush.msra.mxu0 %v137
    %283 = vmatpush.msra.mxu0 %v82
    %284 = vmatpush.msra.mxu0 %v113
    %285 = vmatmul.f32.gmra.mxu0 %v147
    %v286 = vpop.f32.mrf.mxu0
    %v287 = vadd.f32 0.0, %v286
    %288 = vdwg.mxu0
    %289 = vmatpush.msra.mxu0 0.0
    %290 = vmatpush.msra.mxu0 0.0
    %291 = vmatpush.msra.mxu0 0.0
    %292 = vmatpush.msra.mxu0 0.0
    %293 = vmatpush.msra.mxu0 0.0
    %294 = vmatpush.msra.mxu0 0.0
    %295 = vmatpush.msra.mxu0 0.0
    %296 = vmatpush.msra.mxu0 0.0
    %297 = vmatpush.msra.mxu0 0.0
    %298 = vmatpush.msra.mxu0 0.0
    %299 = vmatpush.msra.mxu0 0.0
    %300 = vmatpush.msra.mxu0 0.0
    %301 = vmatpush.msra.mxu0 0.0
    %302 = vmatpush.msra.mxu0 %v144
    %303 = vmatpush.msra.mxu0 %v83
    %304 = vmatpush.msra.mxu0 %v112
    %305 = vmatmul.f32.gmra.mxu0 %v147
    %v306 = vpop.f32.mrf.mxu0
    %v307 = vadd.f32 0.0, %v306
    %308 = vdwg.mxu0
    %v309 = vmul.f32 %v167, %v66
    %v310 = vmul.f32 %v187, %v67
    %v311 = vmul.f32 %v207, %v68
    %v312 = vmul.f32 %v227, %v69
    %v313 = vmul.f32 %v247, %v70
    %v314 = vmul.f32 %v267, %v71
    %v315 = vmul.f32 %v287, %v72
    %v316 = vmul.f32 %v307, %v73
    %v317 = vmul.f32 %v309, %v309
    %v318 = vmul.f32 %v310, %v310
    %v319 = vmul.f32 %v311, %v311
    %v320 = vmul.f32 %v312, %v312
    %v321 = vmul.f32 %v313, %v313
    %v322 = vmul.f32 %v314, %v314
    %v323 = vmul.f32 %v315, %v315
    %v324 = vmul.f32 %v316, %v316
    %v325 = vadd.f32 %v309, %v310
    %v326 = vadd.f32 %v325, %v311
    %v327 = vadd.f32 %v326, %v312
    %v328 = vadd.f32 %v327, %v313
    %v329 = vadd.f32 %v328, %v314
    %v330 = vadd.f32 %v329, %v315
    %v331 = vadd.f32 %v330, %v316
    %332 = vadd.xlane.f32.xlu0 %v331
    %v333 = vpop.xlane.xlu0 %332
    %v334 = vadd.f32 %v317, %v318
    %v335 = vadd.f32 %v334, %v319
    %v336 = vadd.f32 %v335, %v320
    %v337 = vadd.f32 %v336, %v321
    %v338 = vadd.f32 %v337, %v322
    %v339 = vadd.f32 %v338, %v323
    %v340 = vadd.f32 %v339, %v324
    %341 = vadd.xlane.f32.xlu0 %v340
    %v342 = vpop.xlane.xlu0 %341
    %v343 = vmul.f32 %v333, 0.0013368984
    %v344 = vmul.f32 %v342, 0.0013368984
    %v345 = vmul.f32 %v343, %v343
    %v346 = vsub.f32 %v344, %v345
    %v347 = vmax.f32 %v346, 0.0
    %v348 = vadd.f32 %v347, 1e-05
    %v349 = vrsqrt.pop %v348
    %v350 = vmul.f32 %v349, %v348
    %v351 = vmul.f32 %v350, %v349
    %v352 = vmul.f32 0.5, %v351
    %v353 = vsub.f32 1.5, %v352
    %v354 = vmul.f32 %v349, %v353
    %vm355 = vweird.f32 %v348
    %vm356 = vweird.f32 %v349
    %vm357 = vmor %vm355, %vm356
    %v358 = vsel %vm357, %v349, %v354
    %v359 = vmul.f32 %v93, %v358
    %v360 = vmul.f32 %v343, %v359
    %v361 = vsub.f32 %v94, %v360
    %363 = vset.pattern.permute.xlu0 0
    %364 = vperm.xlu0 %363, %v359
    %v365 = vpop.permute.xlu0 %364
    %v367 = vmul.f32 %v309, %v365
    %v368 = vmul.f32 %v310, %v365
    %v369 = vmul.f32 %v311, %v365
    %v370 = vmul.f32 %v312, %v365
    %v371 = vmul.f32 %v313, %v365
    %v372 = vmul.f32 %v314, %v365
    %v373 = vmul.f32 %v315, %v365
    %v374 = vmul.f32 %v316, %v365
    %376 = vset.pattern.permute.xlu0 0
    %377 = vperm.xlu0 %376, %v361
    %v378 = vpop.permute.xlu0 %377
    %v380 = vadd.f32 %v367, %v378
    %v381 = vadd.f32 %v368, %v378
    %v382 = vadd.f32 %v369, %v378
    %v383 = vadd.f32 %v370, %v378
    %v384 = vadd.f32 %v371, %v378
    %v385 = vadd.f32 %v372, %v378
    %v386 = vadd.f32 %v373, %v378
    %v387 = vadd.f32 %v374, %v378
    %vm388 = vcmp.ge.f32.partialorder %v380, 0.0
    %vm389 = vcmp.ge.f32.partialorder %v381, 0.0
    %vm390 = vcmp.ge.f32.partialorder %v382, 0.0
    %vm391 = vcmp.ge.f32.partialorder %v383, 0.0
    %vm392 = vcmp.ge.f32.partialorder %v384, 0.0
    %vm393 = vcmp.ge.f32.partialorder %v385, 0.0
    %vm394 = vcmp.ge.f32.partialorder %v386, 0.0
    %vm395 = vcmp.ge.f32.partialorder %v387, 0.0
    %v396 = vmul.f32 %v380, 0.01
    %v397 = vmul.f32 %v381, 0.01
    %v398 = vmul.f32 %v382, 0.01
    %v399 = vmul.f32 %v383, 0.01
    %v400 = vmul.f32 %v384, 0.01
    %v401 = vmul.f32 %v385, 0.01
    %v402 = vmul.f32 %v386, 0.01
    %v403 = vmul.f32 %v387, 0.01
    %v404 = vsel %vm388, %v380, %v396
    %v405 = vsel %vm389, %v381, %v397
    %v406 = vsel %vm390, %v382, %v398
    %v407 = vsel %vm391, %v383, %v399
    %v408 = vsel %vm392, %v384, %v400
    %v409 = vsel %vm393, %v385, %v401
    %v410 = vsel %vm394, %v386, %v402
    %v411 = vsel %vm395, %v387, %v403
    %v412 = vmul.f32 %v404, %v66
    %v413 = vmul.f32 %v405, %v67
    %v414 = vmul.f32 %v406, %v68
    %v415 = vmul.f32 %v407, %v69
    %v416 = vmul.f32 %v408, %v70
    %v417 = vmul.f32 %v409, %v71
    %v418 = vmul.f32 %v410, %v72
    %v419 = vmul.f32 %v411, %v73
    %s420 = scalar_lea.vmem [#allocation2], 8
    %v421 = vld [vmem:[%s420] sm:$0xff]
    %s422 = scalar_lea.vmem %s2, 16
    %v423 = vld [vmem:[%s422] sm:$0xff]
    %v424 = vld [vmem:[%s422 + $0x8] sm:$0xff]
    %425 = vrot.lane.b32.xlu0 %v412, 1
    %v426 = vpop.permute.xlu0 %425
    %427 = vrot.lane.b32.xlu0 %v413, 1
    %v428 = vpop.permute.xlu0 %427
    %429 = vrot.lane.b32.xlu0 %v414, 1
    %v430 = vpop.permute.xlu0 %429
    %431 = vrot.lane.b32.xlu0 %v415, 1
    %v432 = vpop.permute.xlu0 %431
    %433 = vrot.lane.b32.xlu0 %v416, 1
    %v434 = vpop.permute.xlu0 %433
    %435 = vrot.lane.b32.xlu0 %v417, 1
    %v436 = vpop.permute.xlu0 %435
    %437 = vrot.lane.b32.xlu0 %v418, 1
    %v438 = vpop.permute.xlu0 %437
    %439 = vrot.lane.b32.xlu0 %v419, 1
    %v440 = vpop.permute.xlu0 %439
    %v441 = vsel %vm111, %v438, %v440
    %v442 = vsel %vm111, %v436, %v438
    %v443 = vsel %vm111, %v434, %v436
    %v444 = vsel %vm111, %v432, %v434
    %v445 = vsel %vm111, %v430, %v432
    %v446 = vsel %vm111, %v428, %v430
    %v447 = vsel %vm111, %v426, %v428
    %v448 = vsel %vm111, %v440, %v426
    %449 = vrot.lane.b32.xlu0 %v412, 127
    %v450 = vpop.permute.xlu0 %449
    %451 = vrot.lane.b32.xlu0 %v413, 127
    %v452 = vpop.permute.xlu0 %451
    %453 = vrot.lane.b32.xlu0 %v414, 127
    %v454 = vpop.permute.xlu0 %453
    %455 = vrot.lane.b32.xlu0 %v415, 127
    %v456 = vpop.permute.xlu0 %455
    %457 = vrot.lane.b32.xlu0 %v416, 127
    %v458 = vpop.permute.xlu0 %457
    %459 = vrot.lane.b32.xlu0 %v417, 127
    %v460 = vpop.permute.xlu0 %459
    %461 = vrot.lane.b32.xlu0 %v418, 127
    %v462 = vpop.permute.xlu0 %461
    %463 = vrot.lane.b32.xlu0 %v419, 127
    %v464 = vpop.permute.xlu0 %463
    %v465 = vsel %vm136, %v462, %v464
    %v466 = vsel %vm136, %v460, %v462
    %v467 = vsel %vm136, %v458, %v460
    %v468 = vsel %vm136, %v456, %v458
    %v469 = vsel %vm136, %v454, %v456
    %v470 = vsel %vm136, %v452, %v454
    %v471 = vsel %vm136, %v450, %v452
    %v472 = vsel %vm136, %v464, %v450
    %v474 = vsel %vm145, %v421, 0
    %476 = vmatpush.msra.mxu0 0.0
    %477 = vmatpush.msra.mxu0 0.0
    %478 = vmatpush.msra.mxu0 0.0
    %479 = vmatpush.msra.mxu0 0.0
    %480 = vmatpush.msra.mxu0 0.0
    %481 = vmatpush.msra.mxu0 0.0
    %482 = vmatpush.msra.mxu0 0.0
    %483 = vmatpush.msra.mxu0 0.0
    %484 = vmatpush.msra.mxu0 0.0
    %485 = vmatpush.msra.mxu0 0.0
    %486 = vmatpush.msra.mxu0 0.0
    %487 = vmatpush.msra.mxu0 0.0
    %488 = vmatpush.msra.mxu0 0.0
    %489 = vmatpush.msra.mxu0 %v471
    %490 = vmatpush.msra.mxu0 %v412
    %491 = vmatpush.msra.mxu0 %v448
    %492 = vmatmul.f32.gmra.mxu0 %v474
    %v493 = vpop.f32.mrf.mxu0
    %v494 = vadd.f32 0.0, %v493
    %495 = vdwg.mxu0
    %496 = vmatpush.msra.mxu0 0.0
    %497 = vmatpush.msra.mxu0 0.0
    %498 = vmatpush.msra.mxu0 0.0
    %499 = vmatpush.msra.mxu0 0.0
    %500 = vmatpush.msra.mxu0 0.0
    %501 = vmatpush.msra.mxu0 0.0
    %502 = vmatpush.msra.mxu0 0.0
    %503 = vmatpush.msra.mxu0 0.0
    %504 = vmatpush.msra.mxu0 0.0
    %505 = vmatpush.msra.mxu0 0.0
    %506 = vmatpush.msra.mxu0 0.0
    %507 = vmatpush.msra.mxu0 0.0
    %508 = vmatpush.msra.mxu0 0.0
    %509 = vmatpush.msra.mxu0 %v470
    %510 = vmatpush.msra.mxu0 %v413
    %511 = vmatpush.msra.mxu0 %v447
    %512 = vmatmul.f32.gmra.mxu0 %v474
    %v513 = vpop.f32.mrf.mxu0
    %v514 = vadd.f32 0.0, %v513
    %515 = vdwg.mxu0
    %516 = vmatpush.msra.mxu0 0.0
    %517 = vmatpush.msra.mxu0 0.0
    %518 = vmatpush.msra.mxu0 0.0
    %519 = vmatpush.msra.mxu0 0.0
    %520 = vmatpush.msra.mxu0 0.0
    %521 = vmatpush.msra.mxu0 0.0
    %522 = vmatpush.msra.mxu0 0.0
    %523 = vmatpush.msra.mxu0 0.0
    %524 = vmatpush.msra.mxu0 0.0
    %525 = vmatpush.msra.mxu0 0.0
    %526 = vmatpush.msra.mxu0 0.0
    %527 = vmatpush.msra.mxu0 0.0
    %528 = vmatpush.msra.mxu0 0.0
    %529 = vmatpush.msra.mxu0 %v469
    %530 = vmatpush.msra.mxu0 %v414
    %531 = vmatpush.msra.mxu0 %v446
    %532 = vmatmul.f32.gmra.mxu0 %v474
    %v533 = vpop.f32.mrf.mxu0
    %v534 = vadd.f32 0.0, %v533
    %535 = vdwg.mxu0
    %536 = vmatpush.msra.mxu0 0.0
    %537 = vmatpush.msra.mxu0 0.0
    %538 = vmatpush.msra.mxu0 0.0
    %539 = vmatpush.msra.mxu0 0.0
    %540 = vmatpush.msra.mxu0 0.0
    %541 = vmatpush.msra.mxu0 0.0
    %542 = vmatpush.msra.mxu0 0.0
    %543 = vmatpush.msra.mxu0 0.0
    %544 = vmatpush.msra.mxu0 0.0
    %545 = vmatpush.msra.mxu0 0.0
    %546 = vmatpush.msra.mxu0 0.0
    %547 = vmatpush.msra.mxu0 0.0
    %548 = vmatpush.msra.mxu0 0.0
    %549 = vmatpush.msra.mxu0 %v468
    %550 = vmatpush.msra.mxu0 %v415
    %551 = vmatpush.msra.mxu0 %v445
    %552 = vmatmul.f32.gmra.mxu0 %v474
    %v553 = vpop.f32.mrf.mxu0
    %v554 = vadd.f32 0.0, %v553
    %555 = vdwg.mxu0
    %556 = vmatpush.msra.mxu0 0.0
    %557 = vmatpush.msra.mxu0 0.0
    %558 = vmatpush.msra.mxu0 0.0
    %559 = vmatpush.msra.mxu0 0.0
    %560 = vmatpush.msra.mxu0 0.0
    %561 = vmatpush.msra.mxu0 0.0
    %562 = vmatpush.msra.mxu0 0.0
    %563 = vmatpush.msra.mxu0 0.0
    %564 = vmatpush.msra.mxu0 0.0
    %565 = vmatpush.msra.mxu0 0.0
    %566 = vmatpush.msra.mxu0 0.0
    %567 = vmatpush.msra.mxu0 0.0
    %568 = vmatpush.msra.mxu0 0.0
    %569 = vmatpush.msra.mxu0 %v467
    %570 = vmatpush.msra.mxu0 %v416
    %571 = vmatpush.msra.mxu0 %v444
    %572 = vmatmul.f32.gmra.mxu0 %v474
    %v573 = vpop.f32.mrf.mxu0
    %v574 = vadd.f32 0.0, %v573
    %575 = vdwg.mxu0
    %576 = vmatpush.msra.mxu0 0.0
    %577 = vmatpush.msra.mxu0 0.0
    %578 = vmatpush.msra.mxu0 0.0
    %579 = vmatpush.msra.mxu0 0.0
    %580 = vmatpush.msra.mxu0 0.0
    %581 = vmatpush.msra.mxu0 0.0
    %582 = vmatpush.msra.mxu0 0.0
    %583 = vmatpush.msra.mxu0 0.0
    %584 = vmatpush.msra.mxu0 0.0
    %585 = vmatpush.msra.mxu0 0.0
    %586 = vmatpush.msra.mxu0 0.0
    %587 = vmatpush.msra.mxu0 0.0
    %588 = vmatpush.msra.mxu0 0.0
    %589 = vmatpush.msra.mxu0 %v466
    %590 = vmatpush.msra.mxu0 %v417
    %591 = vmatpush.msra.mxu0 %v443
    %592 = vmatmul.f32.gmra.mxu0 %v474
    %v593 = vpop.f32.mrf.mxu0
    %v594 = vadd.f32 0.0, %v593
    %595 = vdwg.mxu0
    %596 = vmatpush.msra.mxu0 0.0
    %597 = vmatpush.msra.mxu0 0.0
    %598 = vmatpush.msra.mxu0 0.0
    %599 = vmatpush.msra.mxu0 0.0
    %600 = vmatpush.msra.mxu0 0.0
    %601 = vmatpush.msra.mxu0 0.0
    %602 = vmatpush.msra.mxu0 0.0
    %603 = vmatpush.msra.mxu0 0.0
    %604 = vmatpush.msra.mxu0 0.0
    %605 = vmatpush.msra.mxu0 0.0
    %606 = vmatpush.msra.mxu0 0.0
    %607 = vmatpush.msra.mxu0 0.0
    %608 = vmatpush.msra.mxu0 0.0
    %609 = vmatpush.msra.mxu0 %v465
    %610 = vmatpush.msra.mxu0 %v418
    %611 = vmatpush.msra.mxu0 %v442
    %612 = vmatmul.f32.gmra.mxu0 %v474
    %v613 = vpop.f32.mrf.mxu0
    %v614 = vadd.f32 0.0, %v613
    %615 = vdwg.mxu0
    %616 = vmatpush.msra.mxu0 0.0
    %617 = vmatpush.msra.mxu0 0.0
    %618 = vmatpush.msra.mxu0 0.0
    %619 = vmatpush.msra.mxu0 0.0
    %620 = vmatpush.msra.mxu0 0.0
    %621 = vmatpush.msra.mxu0 0.0
    %622 = vmatpush.msra.mxu0 0.0
    %623 = vmatpush.msra.mxu0 0.0
    %624 = vmatpush.msra.mxu0 0.0
    %625 = vmatpush.msra.mxu0 0.0
    %626 = vmatpush.msra.mxu0 0.0
    %627 = vmatpush.msra.mxu0 0.0
    %628 = vmatpush.msra.mxu0 0.0
    %629 = vmatpush.msra.mxu0 %v472
    %630 = vmatpush.msra.mxu0 %v419
    %631 = vmatpush.msra.mxu0 %v441
    %632 = vmatmul.f32.gmra.mxu0 %v474
    %v633 = vpop.f32.mrf.mxu0
    %v634 = vadd.f32 0.0, %v633
    %635 = vdwg.mxu0
    %v636 = vmul.f32 %v494, %v66
    %v637 = vmul.f32 %v514, %v67
    %v638 = vmul.f32 %v534, %v68
    %v639 = vmul.f32 %v554, %v69
    %v640 = vmul.f32 %v574, %v70
    %v641 = vmul.f32 %v594, %v71
    %v642 = vmul.f32 %v614, %v72
    %v643 = vmul.f32 %v634, %v73
    %v644 = vmul.f32 %v636, %v636
    %v645 = vmul.f32 %v637, %v637
    %v646 = vmul.f32 %v638, %v638
    %v647 = vmul.f32 %v639, %v639
    %v648 = vmul.f32 %v640, %v640
    %v649 = vmul.f32 %v641, %v641
    %v650 = vmul.f32 %v642, %v642
    %v651 = vmul.f32 %v643, %v643
    %v652 = vadd.f32 %v636, %v637
    %v653 = vadd.f32 %v652, %v638
    %v654 = vadd.f32 %v653, %v639
    %v655 = vadd.f32 %v654, %v640
    %v656 = vadd.f32 %v655, %v641
    %v657 = vadd.f32 %v656, %v642
    %v658 = vadd.f32 %v657, %v643
    %659 = vadd.xlane.f32.xlu0 %v658
    %v660 = vpop.xlane.xlu0 %659
    %v661 = vadd.f32 %v644, %v645
    %v662 = vadd.f32 %v661, %v646
    %v663 = vadd.f32 %v662, %v647
    %v664 = vadd.f32 %v663, %v648
    %v665 = vadd.f32 %v664, %v649
    %v666 = vadd.f32 %v665, %v650
    %v667 = vadd.f32 %v666, %v651
    %668 = vadd.xlane.f32.xlu0 %v667
    %v669 = vpop.xlane.xlu0 %668
    %v670 = vmul.f32 %v660, 0.0013368984
    %v671 = vmul.f32 %v669, 0.0013368984
    %v672 = vmul.f32 %v670, %v670
    %v673 = vsub.f32 %v671, %v672
    %v674 = vmax.f32 %v673, 0.0
    %v675 = vadd.f32 %v674, 1e-05
    %v676 = vrsqrt.pop %v675
    %v677 = vmul.f32 %v676, %v675
    %v678 = vmul.f32 %v677, %v676
    %v679 = vmul.f32 0.5, %v678
    %v680 = vsub.f32 1.5, %v679
    %v681 = vmul.f32 %v676, %v680
    %vm682 = vweird.f32 %v675
    %vm683 = vweird.f32 %v676
    %vm684 = vmor %vm682, %vm683
    %v685 = vsel %vm684, %v676, %v681
    %v686 = vmul.f32 %v423, %v685
    %v687 = vmul.f32 %v670, %v686
    %v688 = vsub.f32 %v424, %v687
    %690 = vset.pattern.permute.xlu0 0
    %691 = vperm.xlu0 %690, %v686
    %v692 = vpop.permute.xlu0 %691
    %v694 = vmul.f32 %v636, %v692
    %v695 = vmul.f32 %v637, %v692
    %v696 = vmul.f32 %v638, %v692
    %v697 = vmul.f32 %v639, %v692
    %v698 = vmul.f32 %v640, %v692
    %v699 = vmul.f32 %v641, %v692
    %v700 = vmul.f32 %v642, %v692
    %v701 = vmul.f32 %v643, %v692
    %703 = vset.pattern.permute.xlu0 0
    %704 = vperm.xlu0 %703, %v688
    %v705 = vpop.permute.xlu0 %704
    %v707 = vadd.f32 %v694, %v705
    %v708 = vadd.f32 %v695, %v705
    %v709 = vadd.f32 %v696, %v705
    %v710 = vadd.f32 %v697, %v705
    %v711 = vadd.f32 %v698, %v705
    %v712 = vadd.f32 %v699, %v705
    %v713 = vadd.f32 %v700, %v705
    %v714 = vadd.f32 %v701, %v705
    %vm715 = vcmp.ge.f32.partialorder %v707, 0.0
    %vm716 = vcmp.ge.f32.partialorder %v708, 0.0
    %vm717 = vcmp.ge.f32.partialorder %v709, 0.0
    %vm718 = vcmp.ge.f32.partialorder %v710, 0.0
    %vm719 = vcmp.ge.f32.partialorder %v711, 0.0
    %vm720 = vcmp.ge.f32.partialorder %v712, 0.0
    %vm721 = vcmp.ge.f32.partialorder %v713, 0.0
    %vm722 = vcmp.ge.f32.partialorder %v714, 0.0
    %v723 = vmul.f32 %v707, 0.01
    %v724 = vmul.f32 %v708, 0.01
    %v725 = vmul.f32 %v709, 0.01
    %v726 = vmul.f32 %v710, 0.01
    %v727 = vmul.f32 %v711, 0.01
    %v728 = vmul.f32 %v712, 0.01
    %v729 = vmul.f32 %v713, 0.01
    %v730 = vmul.f32 %v714, 0.01
    %v731 = vsel %vm715, %v707, %v723
    %v732 = vsel %vm716, %v708, %v724
    %v733 = vsel %vm717, %v709, %v725
    %v734 = vsel %vm718, %v710, %v726
    %v735 = vsel %vm719, %v711, %v727
    %v736 = vsel %vm720, %v712, %v728
    %v737 = vsel %vm721, %v713, %v729
    %v738 = vsel %vm722, %v714, %v730
    %v739 = vmul.f32 %v731, %v66
    %v740 = vmul.f32 %v732, %v67
    %v741 = vmul.f32 %v733, %v68
    %v742 = vmul.f32 %v734, %v69
    %v743 = vmul.f32 %v735, %v70
    %v744 = vmul.f32 %v736, %v71
    %v745 = vmul.f32 %v737, %v72
    %v746 = vmul.f32 %v738, %v73
    %s747 = scalar_lea.vmem [#allocation2], 16
    %v748 = vld [vmem:[%s747] sm:$0xff]
    %s749 = scalar_lea.vmem %s2, 32
    %v750 = vld [vmem:[%s749] sm:$0xff]
    %v751 = vld [vmem:[%s749 + $0x8] sm:$0xff]
    %752 = vrot.lane.b32.xlu0 %v739, 1
    %v753 = vpop.permute.xlu0 %752
    %754 = vrot.lane.b32.xlu0 %v740, 1
    %v755 = vpop.permute.xlu0 %754
    %756 = vrot.lane.b32.xlu0 %v741, 1
    %v757 = vpop.permute.xlu0 %756
    %758 = vrot.lane.b32.xlu0 %v742, 1
    %v759 = vpop.permute.xlu0 %758
    %760 = vrot.lane.b32.xlu0 %v743, 1
    %v761 = vpop.permute.xlu0 %760
    %762 = vrot.lane.b32.xlu0 %v744, 1
    %v763 = vpop.permute.xlu0 %762
    %764 = vrot.lane.b32.xlu0 %v745, 1
    %v765 = vpop.permute.xlu0 %764
    %766 = vrot.lane.b32.xlu0 %v746, 1
    %v767 = vpop.permute.xlu0 %766
    %v768 = vsel %vm111, %v765, %v767
    %v769 = vsel %vm111, %v763, %v765
    %v770 = vsel %vm111, %v761, %v763
    %v771 = vsel %vm111, %v759, %v761
    %v772 = vsel %vm111, %v757, %v759
    %v773 = vsel %vm111, %v755, %v757
    %v774 = vsel %vm111, %v753, %v755
    %v775 = vsel %vm111, %v767, %v753
    %776 = vrot.lane.b32.xlu0 %v739, 127
    %v777 = vpop.permute.xlu0 %776
    %778 = vrot.lane.b32.xlu0 %v740, 127
    %v779 = vpop.permute.xlu0 %778
    %780 = vrot.lane.b32.xlu0 %v741, 127
    %v781 = vpop.permute.xlu0 %780
    %782 = vrot.lane.b32.xlu0 %v742, 127
    %v783 = vpop.permute.xlu0 %782
    %784 = vrot.lane.b32.xlu0 %v743, 127
    %v785 = vpop.permute.xlu0 %784
    %786 = vrot.lane.b32.xlu0 %v744, 127
    %v787 = vpop.permute.xlu0 %786
    %788 = vrot.lane.b32.xlu0 %v745, 127
    %v789 = vpop.permute.xlu0 %788
    %790 = vrot.lane.b32.xlu0 %v746, 127
    %v791 = vpop.permute.xlu0 %790
    %v792 = vsel %vm136, %v789, %v791
    %v793 = vsel %vm136, %v787, %v789
    %v794 = vsel %vm136, %v785, %v787
    %v795 = vsel %vm136, %v783, %v785
    %v796 = vsel %vm136, %v781, %v783
    %v797 = vsel %vm136, %v779, %v781
    %v798 = vsel %vm136, %v777, %v779
    %v799 = vsel %vm136, %v791, %v777
    %v801 = vsel %vm145, %v748, 0
    %803 = vmatpush.msra.mxu0 0.0
    %804 = vmatpush.msra.mxu0 0.0
    %805 = vmatpush.msra.mxu0 0.0
    %806 = vmatpush.msra.mxu0 0.0
    %807 = vmatpush.msra.mxu0 0.0
    %808 = vmatpush.msra.mxu0 0.0
    %809 = vmatpush.msra.mxu0 0.0
    %810 = vmatpush.msra.mxu0 0.0
    %811 = vmatpush.msra.mxu0 0.0
    %812 = vmatpush.msra.mxu0 0.0
    %813 = vmatpush.msra.mxu0 0.0
    %814 = vmatpush.msra.mxu0 0.0
    %815 = vmatpush.msra.mxu0 0.0
    %816 = vmatpush.msra.mxu0 %v798
    %817 = vmatpush.msra.mxu0 %v739
    %818 = vmatpush.msra.mxu0 %v775
    %819 = vmatmul.f32.gmra.mxu0 %v801
    %v820 = vpop.f32.mrf.mxu0
    %v821 = vadd.f32 0.0, %v820
    %822 = vdwg.mxu0
    %823 = vmatpush.msra.mxu0 0.0
    %824 = vmatpush.msra.mxu0 0.0
    %825 = vmatpush.msra.mxu0 0.0
    %826 = vmatpush.msra.mxu0 0.0
    %827 = vmatpush.msra.mxu0 0.0
    %828 = vmatpush.msra.mxu0 0.0
    %829 = vmatpush.msra.mxu0 0.0
    %830 = vmatpush.msra.mxu0 0.0
    %831 = vmatpush.msra.mxu0 0.0
    %832 = vmatpush.msra.mxu0 0.0
    %833 = vmatpush.msra.mxu0 0.0
    %834 = vmatpush.msra.mxu0 0.0
    %835 = vmatpush.msra.mxu0 0.0
    %836 = vmatpush.msra.mxu0 %v797
    %837 = vmatpush.msra.mxu0 %v740
    %838 = vmatpush.msra.mxu0 %v774
    %839 = vmatmul.f32.gmra.mxu0 %v801
    %v840 = vpop.f32.mrf.mxu0
    %v841 = vadd.f32 0.0, %v840
    %842 = vdwg.mxu0
    %843 = vmatpush.msra.mxu0 0.0
    %844 = vmatpush.msra.mxu0 0.0
    %845 = vmatpush.msra.mxu0 0.0
    %846 = vmatpush.msra.mxu0 0.0
    %847 = vmatpush.msra.mxu0 0.0
    %848 = vmatpush.msra.mxu0 0.0
    %849 = vmatpush.msra.mxu0 0.0
    %850 = vmatpush.msra.mxu0 0.0
    %851 = vmatpush.msra.mxu0 0.0
    %852 = vmatpush.msra.mxu0 0.0
    %853 = vmatpush.msra.mxu0 0.0
    %854 = vmatpush.msra.mxu0 0.0
    %855 = vmatpush.msra.mxu0 0.0
    %856 = vmatpush.msra.mxu0 %v796
    %857 = vmatpush.msra.mxu0 %v741
    %858 = vmatpush.msra.mxu0 %v773
    %859 = vmatmul.f32.gmra.mxu0 %v801
    %v860 = vpop.f32.mrf.mxu0
    %v861 = vadd.f32 0.0, %v860
    %862 = vdwg.mxu0
    %863 = vmatpush.msra.mxu0 0.0
    %864 = vmatpush.msra.mxu0 0.0
    %865 = vmatpush.msra.mxu0 0.0
    %866 = vmatpush.msra.mxu0 0.0
    %867 = vmatpush.msra.mxu0 0.0
    %868 = vmatpush.msra.mxu0 0.0
    %869 = vmatpush.msra.mxu0 0.0
    %870 = vmatpush.msra.mxu0 0.0
    %871 = vmatpush.msra.mxu0 0.0
    %872 = vmatpush.msra.mxu0 0.0
    %873 = vmatpush.msra.mxu0 0.0
    %874 = vmatpush.msra.mxu0 0.0
    %875 = vmatpush.msra.mxu0 0.0
    %876 = vmatpush.msra.mxu0 %v795
    %877 = vmatpush.msra.mxu0 %v742
    %878 = vmatpush.msra.mxu0 %v772
    %879 = vmatmul.f32.gmra.mxu0 %v801
    %v880 = vpop.f32.mrf.mxu0
    %v881 = vadd.f32 0.0, %v880
    %882 = vdwg.mxu0
    %883 = vmatpush.msra.mxu0 0.0
    %884 = vmatpush.msra.mxu0 0.0
    %885 = vmatpush.msra.mxu0 0.0
    %886 = vmatpush.msra.mxu0 0.0
    %887 = vmatpush.msra.mxu0 0.0
    %888 = vmatpush.msra.mxu0 0.0
    %889 = vmatpush.msra.mxu0 0.0
    %890 = vmatpush.msra.mxu0 0.0
    %891 = vmatpush.msra.mxu0 0.0
    %892 = vmatpush.msra.mxu0 0.0
    %893 = vmatpush.msra.mxu0 0.0
    %894 = vmatpush.msra.mxu0 0.0
    %895 = vmatpush.msra.mxu0 0.0
    %896 = vmatpush.msra.mxu0 %v794
    %897 = vmatpush.msra.mxu0 %v743
    %898 = vmatpush.msra.mxu0 %v771
    %899 = vmatmul.f32.gmra.mxu0 %v801
    %v900 = vpop.f32.mrf.mxu0
    %v901 = vadd.f32 0.0, %v900
    %902 = vdwg.mxu0
    %903 = vmatpush.msra.mxu0 0.0
    %904 = vmatpush.msra.mxu0 0.0
    %905 = vmatpush.msra.mxu0 0.0
    %906 = vmatpush.msra.mxu0 0.0
    %907 = vmatpush.msra.mxu0 0.0
    %908 = vmatpush.msra.mxu0 0.0
    %909 = vmatpush.msra.mxu0 0.0
    %910 = vmatpush.msra.mxu0 0.0
    %911 = vmatpush.msra.mxu0 0.0
    %912 = vmatpush.msra.mxu0 0.0
    %913 = vmatpush.msra.mxu0 0.0
    %914 = vmatpush.msra.mxu0 0.0
    %915 = vmatpush.msra.mxu0 0.0
    %916 = vmatpush.msra.mxu0 %v793
    %917 = vmatpush.msra.mxu0 %v744
    %918 = vmatpush.msra.mxu0 %v770
    %919 = vmatmul.f32.gmra.mxu0 %v801
    %v920 = vpop.f32.mrf.mxu0
    %v921 = vadd.f32 0.0, %v920
    %922 = vdwg.mxu0
    %923 = vmatpush.msra.mxu0 0.0
    %924 = vmatpush.msra.mxu0 0.0
    %925 = vmatpush.msra.mxu0 0.0
    %926 = vmatpush.msra.mxu0 0.0
    %927 = vmatpush.msra.mxu0 0.0
    %928 = vmatpush.msra.mxu0 0.0
    %929 = vmatpush.msra.mxu0 0.0
    %930 = vmatpush.msra.mxu0 0.0
    %931 = vmatpush.msra.mxu0 0.0
    %932 = vmatpush.msra.mxu0 0.0
    %933 = vmatpush.msra.mxu0 0.0
    %934 = vmatpush.msra.mxu0 0.0
    %935 = vmatpush.msra.mxu0 0.0
    %936 = vmatpush.msra.mxu0 %v792
    %937 = vmatpush.msra.mxu0 %v745
    %938 = vmatpush.msra.mxu0 %v769
    %939 = vmatmul.f32.gmra.mxu0 %v801
    %v940 = vpop.f32.mrf.mxu0
    %v941 = vadd.f32 0.0, %v940
    %942 = vdwg.mxu0
    %943 = vmatpush.msra.mxu0 0.0
    %944 = vmatpush.msra.mxu0 0.0
    %945 = vmatpush.msra.mxu0 0.0
    %946 = vmatpush.msra.mxu0 0.0
    %947 = vmatpush.msra.mxu0 0.0
    %948 = vmatpush.msra.mxu0 0.0
    %949 = vmatpush.msra.mxu0 0.0
    %950 = vmatpush.msra.mxu0 0.0
    %951 = vmatpush.msra.mxu0 0.0
    %952 = vmatpush.msra.mxu0 0.0
    %953 = vmatpush.msra.mxu0 0.0
    %954 = vmatpush.msra.mxu0 0.0
    %955 = vmatpush.msra.mxu0 0.0
    %956 = vmatpush.msra.mxu0 %v799
    %957 = vmatpush.msra.mxu0 %v746
    %958 = vmatpush.msra.mxu0 %v768
    %959 = vmatmul.f32.gmra.mxu0 %v801
    %v960 = vpop.f32.mrf.mxu0
    %v961 = vadd.f32 0.0, %v960
    %962 = vdwg.mxu0
    %v963 = vmul.f32 %v821, %v66
    %v964 = vmul.f32 %v841, %v67
    %v965 = vmul.f32 %v861, %v68
    %v966 = vmul.f32 %v881, %v69
    %v967 = vmul.f32 %v901, %v70
    %v968 = vmul.f32 %v921, %v71
    %v969 = vmul.f32 %v941, %v72
    %v970 = vmul.f32 %v961, %v73
    %v971 = vmul.f32 %v963, %v963
    %v972 = vmul.f32 %v964, %v964
    %v973 = vmul.f32 %v965, %v965
    %v974 = vmul.f32 %v966, %v966
    %v975 = vmul.f32 %v967, %v967
    %v976 = vmul.f32 %v968, %v968
    %v977 = vmul.f32 %v969, %v969
    %v978 = vmul.f32 %v970, %v970
    %v979 = vadd.f32 %v963, %v964
    %v980 = vadd.f32 %v979, %v965
    %v981 = vadd.f32 %v980, %v966
    %v982 = vadd.f32 %v981, %v967
    %v983 = vadd.f32 %v982, %v968
    %v984 = vadd.f32 %v983, %v969
    %v985 = vadd.f32 %v984, %v970
    %986 = vadd.xlane.f32.xlu0 %v985
    %v987 = vpop.xlane.xlu0 %986
    %v988 = vadd.f32 %v971, %v972
    %v989 = vadd.f32 %v988, %v973
    %v990 = vadd.f32 %v989, %v974
    %v991 = vadd.f32 %v990, %v975
    %v992 = vadd.f32 %v991, %v976
    %v993 = vadd.f32 %v992, %v977
    %v994 = vadd.f32 %v993, %v978
    %995 = vadd.xlane.f32.xlu0 %v994
    %v996 = vpop.xlane.xlu0 %995
    %v997 = vmul.f32 %v987, 0.0013368984
    %v998 = vmul.f32 %v996, 0.0013368984
    %v999 = vmul.f32 %v997, %v997
    %v1000 = vsub.f32 %v998, %v999
    %v1001 = vmax.f32 %v1000, 0.0
    %v1002 = vadd.f32 %v1001, 1e-05
    %v1003 = vrsqrt.pop %v1002
    %v1004 = vmul.f32 %v1003, %v1002
    %v1005 = vmul.f32 %v1004, %v1003
    %v1006 = vmul.f32 0.5, %v1005
    %v1007 = vsub.f32 1.5, %v1006
    %v1008 = vmul.f32 %v1003, %v1007
    %vm1009 = vweird.f32 %v1002
    %vm1010 = vweird.f32 %v1003
    %vm1011 = vmor %vm1009, %vm1010
    %v1012 = vsel %vm1011, %v1003, %v1008
    %v1013 = vmul.f32 %v750, %v1012
    %v1014 = vmul.f32 %v997, %v1013
    %v1015 = vsub.f32 %v751, %v1014
    %1017 = vset.pattern.permute.xlu0 0
    %1018 = vperm.xlu0 %1017, %v1013
    %v1019 = vpop.permute.xlu0 %1018
    %v1021 = vmul.f32 %v963, %v1019
    %v1022 = vmul.f32 %v964, %v1019
    %v1023 = vmul.f32 %v965, %v1019
    %v1024 = vmul.f32 %v966, %v1019
    %v1025 = vmul.f32 %v967, %v1019
    %v1026 = vmul.f32 %v968, %v1019
    %v1027 = vmul.f32 %v969, %v1019
    %v1028 = vmul.f32 %v970, %v1019
    %1030 = vset.pattern.permute.xlu0 0
    %1031 = vperm.xlu0 %1030, %v1015
    %v1032 = vpop.permute.xlu0 %1031
    %v1034 = vadd.f32 %v1021, %v1032
    %v1035 = vadd.f32 %v1022, %v1032
    %v1036 = vadd.f32 %v1023, %v1032
    %v1037 = vadd.f32 %v1024, %v1032
    %v1038 = vadd.f32 %v1025, %v1032
    %v1039 = vadd.f32 %v1026, %v1032
    %v1040 = vadd.f32 %v1027, %v1032
    %v1041 = vadd.f32 %v1028, %v1032
    %vm1042 = vcmp.ge.f32.partialorder %v1034, 0.0
    %vm1043 = vcmp.ge.f32.partialorder %v1035, 0.0
    %vm1044 = vcmp.ge.f32.partialorder %v1036, 0.0
    %vm1045 = vcmp.ge.f32.partialorder %v1037, 0.0
    %vm1046 = vcmp.ge.f32.partialorder %v1038, 0.0
    %vm1047 = vcmp.ge.f32.partialorder %v1039, 0.0
    %vm1048 = vcmp.ge.f32.partialorder %v1040, 0.0
    %vm1049 = vcmp.ge.f32.partialorder %v1041, 0.0
    %v1050 = vmul.f32 %v1034, 0.01
    %v1051 = vmul.f32 %v1035, 0.01
    %v1052 = vmul.f32 %v1036, 0.01
    %v1053 = vmul.f32 %v1037, 0.01
    %v1054 = vmul.f32 %v1038, 0.01
    %v1055 = vmul.f32 %v1039, 0.01
    %v1056 = vmul.f32 %v1040, 0.01
    %v1057 = vmul.f32 %v1041, 0.01
    %v1058 = vsel %vm1042, %v1034, %v1050
    %v1059 = vsel %vm1043, %v1035, %v1051
    %v1060 = vsel %vm1044, %v1036, %v1052
    %v1061 = vsel %vm1045, %v1037, %v1053
    %v1062 = vsel %vm1046, %v1038, %v1054
    %v1063 = vsel %vm1047, %v1039, %v1055
    %v1064 = vsel %vm1048, %v1040, %v1056
    %v1065 = vsel %vm1049, %v1041, %v1057
    %v1066 = vmul.f32 %v1058, %v66
    %v1067 = vmul.f32 %v1059, %v67
    %v1068 = vmul.f32 %v1060, %v68
    %v1069 = vmul.f32 %v1061, %v69
    %v1070 = vmul.f32 %v1062, %v70
    %v1071 = vmul.f32 %v1063, %v71
    %v1072 = vmul.f32 %v1064, %v72
    %v1073 = vmul.f32 %v1065, %v73
    %v1074 = vadd.f32 %v1066, %v1067
    %1075 = vadd.xlane.f32.xlu0 %v1074
    %v1076 = vpop.xlane.xlu0 %1075
    %v1077 = vadd.f32 %v1068, %v1069
    %1078 = vadd.xlane.f32.xlu0 %v1077
    %v1079 = vpop.xlane.xlu0 %1078
    %v1080 = vadd.f32 %v1070, %v1071
    %1081 = vadd.xlane.f32.xlu0 %v1080
    %v1082 = vpop.xlane.xlu0 %1081
    %v1083 = vadd.f32 %v1072, %v1073
    %1084 = vadd.xlane.f32.xlu0 %v1083
    %v1085 = vpop.xlane.xlu0 %1084
    %vm1086 = vcmask 7168
    %v1087 = vsel %vm1086, %v1076, %v1079
    %vm1088 = vcmask 15360
    %v1089 = vsel %vm1088, %v1087, %v1082
    %vm1090 = vcmask 23552
    %v1091 = vsel %vm1090, %v1089, %v1085
    %v1092 = vmul.f32 %v1091, 0.0053475937
    %v1093 = vld [vmem:[%s3] sm:$0xff]
    %v1094 = vld [vmem:[%s3 + $0x8] sm:$0xff]
    %v1095 = vld [vmem:[%s3 + $0x10] sm:$0xff]
    %v1096 = vld [vmem:[%s3 + $0x18] sm:$0xff]
    %v1097 = vld [vmem:[%s3 + $0x20] sm:$0x1f]
    %1099 = vset.pattern.permute.xlu0 8
    %1100 = vperm.xlu0 %1099, %v1093
    %v1101 = vpop.permute.xlu0 %1100
    %1104 = vset.pattern.permute.xlu0 8
    %1105 = vperm.xlu0 %1104, %v1094
    %v1106 = vpop.permute.xlu0 %1105
    %1109 = vset.pattern.permute.xlu0 8
    %1110 = vperm.xlu0 %1109, %v1095
    %v1111 = vpop.permute.xlu0 %1110
    %1114 = vset.pattern.permute.xlu0 8
    %1115 = vperm.xlu0 %1114, %v1096
    %v1116 = vpop.permute.xlu0 %1115
    %vm1118 = vcmask 64512
    %v1119 = vsel %vm1118, %v1093, 0
    %v1121 = vsel %vm1118, %v1094, 0
    %v1123 = vsel %vm1118, %v1095, 0
    %v1125 = vsel %vm1118, %v1096, 0
    %1127 = vmatpush.msra.mxu0 0.0
    %1128 = vmatpush.msra.mxu0 0.0
    %1129 = vmatpush.msra.mxu0 0.0
    %1130 = vmatpush.msra.mxu0 0.0
    %1131 = vmatpush.msra.mxu0 0.0
    %1132 = vmatpush.msra.mxu0 0.0
    %1133 = vmatpush.msra.mxu0 0.0
    %1134 = vmatpush.msra.mxu0 0.0
    %1135 = vmatpush.msra.mxu0 0.0
    %1136 = vmatpush.msra.mxu0 0.0
    %1137 = vmatpush.msra.mxu0 0.0
    %1138 = vmatpush.msra.mxu0 0.0
    %1139 = vmatpush.msra.mxu0 0.0
    %1140 = vmatpush.msra.mxu0 0.0
    %1141 = vmatpush.msra.mxu0 0.0
    %1142 = vmatpush.msra.mxu0 %v1092
    %1143 = vmatmul.f32.gmra.mxu0 %v1119
    %v1144 = vpop.f32.mrf.mxu0
    %v1145 = vadd.f32 %v1101, %v1144
    %1146 = vmatmul.f32.gmra.mxu0 %v1121
    %v1147 = vpop.f32.mrf.mxu0
    %v1148 = vadd.f32 %v1106, %v1147
    %1149 = vmatmul.f32.gmra.mxu0 %v1123
    %v1150 = vpop.f32.mrf.mxu0
    %v1151 = vadd.f32 %v1111, %v1150
    %1152 = vmatmul.f32.gmra.mxu0 %v1125
    %v1153 = vpop.f32.mrf.mxu0
    %v1154 = vadd.f32 %v1116, %v1153
    %1155 = vdwg.mxu0
    %vm1156 = vcmp.ge.f32.partialorder %v1145, 0.0
    %vm1157 = vcmp.ge.f32.partialorder %v1148, 0.0
    %vm1158 = vcmp.ge.f32.partialorder %v1151, 0.0
    %vm1159 = vcmp.ge.f32.partialorder %v1154, 0.0
    %v1160 = vmul.f32 %v1145, 0.01
    %v1161 = vmul.f32 %v1148, 0.01
    %v1162 = vmul.f32 %v1151, 0.01
    %v1163 = vmul.f32 %v1154, 0.01
    %v1164 = vsel %vm1156, %v1145, %v1160
    %v1165 = vsel %vm1157, %v1148, %v1161
    %v1166 = vsel %vm1158, %v1151, %v1162
    %v1167 = vsel %vm1159, %v1154, %v1163
    %1169 = vset.pattern.permute.xlu0 32
    %1170 = vperm.xlu0 %1169, %v1097
    %v1171 = vpop.permute.xlu0 %1170
    %vm1173 = vcmask 261120
    %v1174 = vsel %vm1173, %v1097, 0
    %1176 = vmatpush.msra.mxu0 0.0
    %1177 = vmatpush.msra.mxu0 0.0
    %1178 = vmatpush.msra.mxu0 0.0
    %1179 = vmatpush.msra.mxu0 0.0
    %1180 = vmatpush.msra.mxu0 0.0
    %1181 = vmatpush.msra.mxu0 0.0
    %1182 = vmatpush.msra.mxu0 0.0
    %1183 = vmatpush.msra.mxu0 0.0
    %1184 = vmatpush.msra.mxu0 0.0
    %1185 = vmatpush.msra.mxu0 0.0
    %1186 = vmatpush.msra.mxu0 0.0
    %1187 = vmatpush.msra.mxu0 0.0
    %1188 = vmatpush.msra.mxu0 %v1167
    %1189 = vmatpush.msra.mxu0 %v1166
    %1190 = vmatpush.msra.mxu0 %v1165
    %1191 = vmatpush.msra.mxu0 %v1164
    %1192 = vmatmul.f32.gmra.mxu0 %v1174
    %v1193 = vpop.f32.mrf.mxu0
    %v1194 = vadd.f32 %v1171, %v1193
    %1195 = vdwg.mxu0
    %vm1196 = vcmask 28672
    %1197 = vst.msk [vmem:[%s4] sm:$0x1f] %vm1196, %v1194
    // Predicated region
    $region22: #{tpu_custom_call.1} parent=1 // pred_check
      _
    $region23: #{tpu_custom_call.1} parent=1 // pred_check_branch
      %1199 = sbr.rel (0) target = $region25
    $region24: #{tpu_custom_call.1} parent=1 // pred_region
      _
    $region25: #{tpu_custom_call.1} parent=1 // pred_fallthru
      _
    // Predicated region
    $region26: #{tpu_custom_call.1} parent=1 // pred_check
      _
    $region27: #{tpu_custom_call.1} parent=1 // pred_check_branch
      %1201 = sbr.rel (0) target = $region29
    $region28: #{tpu_custom_call.1} parent=1 // pred_region
      _
    $region29: #{tpu_custom_call.1} parent=1 // pred_fallthru
      _
    %1202 = vsyncpa [#allocation3], 1

</llo_original>
